<compile_context>
chip_gen: v7x
topology: tpu7x:2x2x1
jax: 0.10.0
libtpu: 0.0.40
codegen_flags: <defaults>
</compile_context>

<pallas_src>
import math
import jax
import jax.numpy as jnp
from jax.experimental import pallas as pl
from jax.experimental.pallas import tpu as pltpu


def _make_encoder_kernel(seq, d_model, d_k, d_v, n_heads, with_attn):
    scale = 1.0 / math.sqrt(d_k)
    eps = 1e-5  # nn.LayerNorm default
    hq = n_heads * d_k

    def layer_norm(v, g, b):
        mu = jnp.mean(v, axis=-1, keepdims=True)
        var = jnp.mean((v - mu) ** 2, axis=-1, keepdims=True)  # biased, like torch
        return (v - mu) * jax.lax.rsqrt(var + eps) * g + b

    def kernel(x_ref, bias_ref, wqkv_ref, wo_ref, ln1g_ref, ln1b_ref,
               w1_ref, w2_ref, ln2g_ref, ln2b_ref, out_ref, *maybe_attn):
        x = x_ref[0]        # (S, D)  f32 residual
        bias = bias_ref[0]  # (S, S)  f32 additive mask (-1e9 where masked)

        # ---- fused Q/K/V projection: one bf16 MXU pass, f32 accumulation ----
        qkv = jnp.dot(x.astype(jnp.bfloat16), wqkv_ref[...],
                      preferred_element_type=jnp.float32)   # (S, 2*H*dk + H*dv)
        q = qkv[:, :hq]
        k = qkv[:, hq:2 * hq]
        v = qkv[:, 2 * hq:]

        # gather heads once into (H, S, d) so the attention matmuls are batched
        q3 = jnp.stack([q[:, h * d_k:(h + 1) * d_k] for h in range(n_heads)],
                       axis=0).astype(jnp.bfloat16)          # (H, S, dk)
        k3 = jnp.stack([k[:, h * d_k:(h + 1) * d_k] for h in range(n_heads)],
                       axis=0).astype(jnp.bfloat16)          # (H, S, dk)
        v3 = jnp.stack([v[:, h * d_v:(h + 1) * d_v] for h in range(n_heads)],
                       axis=0).astype(jnp.bfloat16)          # (H, S, dv)

        # ---- scaled dot-product attention, all heads at once ----
        scores = jnp.einsum('hqd,hkd->hqk', q3, k3,
                            preferred_element_type=jnp.float32) * scale
        scores = scores + bias[None, :, :]                   # (H, S, S) f32

        m = jnp.max(scores, axis=-1, keepdims=True)
        e = jnp.exp(scores - m)
        denom = jnp.sum(e, axis=-1, keepdims=True)
        attn = e * pl.reciprocal(denom, approx=True)         # softmax, (H, S, S)

        if with_attn:
            maybe_attn[0][0] = attn                          # single store

        ctx = jnp.einsum('hqk,hkd->hqd', attn.astype(jnp.bfloat16), v3,
                         preferred_element_type=jnp.float32)  # (H, S, dv)
        # concat over heads -> one fused output-projection matmul
        ctx_cat = jnp.concatenate([ctx[h] for h in range(n_heads)], axis=-1)
        proj = jnp.dot(ctx_cat.astype(jnp.bfloat16), wo_ref[...],
                       preferred_element_type=jnp.float32)    # (S, D)

        # ---- residual + LayerNorm (attention sublayer), f32 ----
        ln1 = layer_norm(proj + x, ln1g_ref[...], ln1b_ref[...])

        # ---- position-wise FFN: Linear -> ReLU -> Linear (no bias) ----
        hid = jnp.maximum(
            jnp.dot(ln1.astype(jnp.bfloat16), w1_ref[...],
                    preferred_element_type=jnp.float32), 0.0)
        ffn = jnp.dot(hid.astype(jnp.bfloat16), w2_ref[...],
                      preferred_element_type=jnp.float32)

        # ---- residual + LayerNorm (FFN sublayer) ----
        out_ref[0] = layer_norm(ffn + ln1, ln2g_ref[...], ln2b_ref[...])

    return kernel


def encoder_layer(x, mask, params, *, d_ffn, d_k, d_v, n_heads,
                  return_attention=True):
    """x: (B, S, D) f32, mask: (B, S, S) f32 (1.0 == masked key position)."""
    B, S, D = x.shape
    (wq, wk, wv, wo, ln1g, ln1b, w1, w2, ln2g, ln2b) = params

    # fuse QKV weights + cast MXU weights to bf16 in the wrapper (halves DMA)
    wqkv = jnp.concatenate([wq, wk, wv], axis=1).astype(jnp.bfloat16)
    wo_b = wo.astype(jnp.bfloat16)
    w1_b = w1.astype(jnp.bfloat16)
    w2_b = w2.astype(jnp.bfloat16)

    # additive mask bias, computed once (kept in f32; -1e9 + O(1) rounds to -1e9)
    bias = jnp.where(mask > 0.0, jnp.float32(-1e9), jnp.float32(0.0))

    kernel = _make_encoder_kernel(S, D, d_k, d_v, n_heads, return_attention)

    def full(shape):
        # whole-array block, broadcast across the batch grid
        return pl.BlockSpec(shape, lambda b, _n=len(shape): (0,) * _n)

    in_specs = [
        pl.BlockSpec((1, S, D), lambda b: (b, 0, 0)),   # x
        pl.BlockSpec((1, S, S), lambda b: (b, 0, 0)),   # mask bias
        full(wqkv.shape), full(wo_b.shape),
        full(ln1g.shape), full(ln1b.shape),
        full(w1_b.shape), full(w2_b.shape),
        full(ln2g.shape), full(ln2b.shape),
    ]
    out_specs = [pl.BlockSpec((1, S, D), lambda b: (b, 0, 0))]
    out_shape = [jax.ShapeDtypeStruct((B, S, D), jnp.float32)]
    if return_attention:
        out_specs.append(pl.BlockSpec((1, n_heads, S, S), lambda b: (b, 0, 0, 0)))
        out_shape.append(jax.ShapeDtypeStruct((B, n_heads, S, S), jnp.float32))

    results = pl.pallas_call(
        kernel,
        grid=(B,),
        in_specs=in_specs,
        out_specs=out_specs,
        out_shape=out_shape,
        compiler_params=pltpu.CompilerParams(dimension_semantics=("parallel",)),
    )(x, bias, wqkv, wo_b, ln1g, ln1b, w1_b, w2_b, ln2g, ln2b)

    if return_attention:
        return results[0], results[1]
    return results[0]


def init_params(key, d_model, d_ffn, d_k, d_v, n_heads):
    ks = jax.random.split(key, 6)
    std = 0.02
    wq = jax.random.normal(ks[0], (d_model, n_heads * d_k), jnp.float32) * std
    wk = jax.random.normal(ks[1], (d_model, n_heads * d_k), jnp.float32) * std
    wv = jax.random.normal(ks[2], (d_model, n_heads * d_v), jnp.float32) * std
    wo = jax.random.normal(ks[3], (n_heads * d_v, d_model), jnp.float32) * std
    w1 = jax.random.normal(ks[4], (d_model, d_ffn), jnp.float32) * std
    w2 = jax.random.normal(ks[5], (d_ffn, d_model), jnp.float32) * std
    ln1g = jnp.ones((1, d_model), jnp.float32)
    ln1b = jnp.zeros((1, d_model), jnp.float32)
    ln2g = jnp.ones((1, d_model), jnp.float32)
    ln2b = jnp.zeros((1, d_model), jnp.float32)
    return (wq, wk, wv, wo, ln1g, ln1b, w1, w2, ln2g, ln2b)


def encoder_layer_ref(x, mask, params, *, d_k, d_v, n_heads):
    """Pure-JAX f32 reference matching the PyTorch module semantics."""
    (wq, wk, wv, wo, ln1g, ln1b, w1, w2, ln2g, ln2b) = params
    B, S, D = x.shape
    eps = 1e-5

    def ln(v, g, b):
        mu = v.mean(-1, keepdims=True)
        var = ((v - mu) ** 2).mean(-1, keepdims=True)
        return (v - mu) / jnp.sqrt(var + eps) * g + b

    q = (x @ wq).reshape(B, S, n_heads, d_k).transpose(0, 2, 1, 3)
    k = (x @ wk).reshape(B, S, n_heads, d_k).transpose(0, 2, 1, 3)
    v = (x @ wv).reshape(B, S, n_heads, d_v).transpose(0, 2, 1, 3)
    scores = jnp.einsum('bhqd,bhkd->bhqk', q, k) / math.sqrt(d_k)
    scores = jnp.where(mask[:, None, :, :] > 0.0, jnp.float32(-1e9), scores)
    attn = jax.nn.softmax(scores, axis=-1)
    ctx = jnp.einsum('bhqk,bhkd->bhqd', attn, v)
    ctx = ctx.transpose(0, 2, 1, 3).reshape(B, S, n_heads * d_v)
    proj = ctx @ wo
    ln1 = ln(proj + x, ln1g, ln1b)
    ffn = jnp.maximum(ln1 @ w1, 0.0) @ w2
    out = ln(ffn + ln1, ln2g, ln2b)
    return out, attn


if __name__ == "__main__":
    B, S = 2, 8
    D_MODEL, D_FFN, D_K, D_V, N_HEADS = 32, 64, 8, 8, 4

    key = jax.random.PRNGKey(0)
    k_x, k_p = jax.random.split(key)

    x = jax.random.normal(k_x, (B, S, D_MODEL), jnp.float32)

    # padding-style self-attention mask: key positions >= valid_len are masked
    valid_len = jnp.array([S, S - 2], dtype=jnp.int32)           # (B,)
    key_pad = (jnp.arange(S)[None, :] >= valid_len[:, None])     # (B, S) bool
    mask = jnp.broadcast_to(key_pad[:, None, :], (B, S, S)).astype(jnp.float32)

    params = init_params(k_p, D_MODEL, D_FFN, D_K, D_V, N_HEADS)

    outputs, attention = encoder_layer(
        x, mask, params, d_ffn=D_FFN, d_k=D_K, d_v=D_V, n_heads=N_HEADS)
    outputs = jax.block_until_ready(outputs)
    attention = jax.block_until_ready(attention)

    ref_out, ref_attn = encoder_layer_ref(
        x, mask, params, d_k=D_K, d_v=D_V, n_heads=N_HEADS)

    assert outputs.shape == (B, S, D_MODEL)
    assert attention.shape == (B, N_HEADS, S, S)
    assert bool(jnp.all(jnp.isfinite(outputs)))
    # softmax rows sum to 1 (approx reciprocal -> slightly loose tolerance)
    assert bool(jnp.allclose(attention.sum(-1), 1.0, atol=5e-3))
    # matches the f32 reference within bf16-matmul / approx-reciprocal error
    assert bool(jnp.allclose(attention, ref_attn, atol=1e-2))
    assert bool(jnp.allclose(outputs, ref_out, atol=2e-2))

    # attention-probs output is optional: skips the O(S^2) HBM writeback
    out_only = encoder_layer(x, mask, params, d_ffn=D_FFN, d_k=D_K, d_v=D_V,
                             n_heads=N_HEADS, return_attention=False)
    out_only = jax.block_until_ready(out_only)
    assert bool(jnp.allclose(out_only, outputs, atol=1e-5))

    print("KERNEL_OK")
</pallas_src>

<mosaic_0001>
module attributes {stable_mosaic.version = 11 : i64} {
  func.func @kernel(%arg0: i32, %arg1: memref<1x8x32xf32, #tpu.memory_space<vmem>>, %arg2: memref<1x8x8xf32, #tpu.memory_space<vmem>>, %arg3: memref<32x96xbf16, #tpu.memory_space<vmem>>, %arg4: memref<32x32xbf16, #tpu.memory_space<vmem>>, %arg5: memref<1x32xf32, #tpu.memory_space<vmem>>, %arg6: memref<1x32xf32, #tpu.memory_space<vmem>>, %arg7: memref<32x64xbf16, #tpu.memory_space<vmem>>, %arg8: memref<64x32xbf16, #tpu.memory_space<vmem>>, %arg9: memref<1x32xf32, #tpu.memory_space<vmem>>, %arg10: memref<1x32xf32, #tpu.memory_space<vmem>>, %arg11: memref<1x8x32xf32, #tpu.memory_space<vmem>>, %arg12: memref<1x4x8x8xf32, #tpu.memory_space<vmem>>) attributes {dimension_semantics = [#tpu.dimension_semantics<parallel>], iteration_bounds = array<i64: 2>, scalar_prefetch = 0 : i64, scratch_operands = 0 : i64, tpu.core_type = #tpu.core_type<tc>, window_params = [{transform_indices = @transform_0, window_bounds = array<i64: 1, 8, 32>}, {transform_indices = @transform_1, window_bounds = array<i64: 1, 8, 8>}, {pipeline_mode = #tpu.pipeline_mode<synchronous>, transform_indices = @transform_2, window_bounds = array<i64: 32, 96>}, {pipeline_mode = #tpu.pipeline_mode<synchronous>, transform_indices = @transform_3, window_bounds = array<i64: 32, 32>}, {pipeline_mode = #tpu.pipeline_mode<synchronous>, transform_indices = @transform_4, window_bounds = array<i64: 1, 32>}, {pipeline_mode = #tpu.pipeline_mode<synchronous>, transform_indices = @transform_5, window_bounds = array<i64: 1, 32>}, {pipeline_mode = #tpu.pipeline_mode<synchronous>, transform_indices = @transform_6, window_bounds = array<i64: 32, 64>}, {pipeline_mode = #tpu.pipeline_mode<synchronous>, transform_indices = @transform_7, window_bounds = array<i64: 64, 32>}, {pipeline_mode = #tpu.pipeline_mode<synchronous>, transform_indices = @transform_8, window_bounds = array<i64: 1, 32>}, {pipeline_mode = #tpu.pipeline_mode<synchronous>, transform_indices = @transform_9, window_bounds = array<i64: 1, 32>}, {transform_indices = @transform_10, window_bounds = array<i64: 1, 8, 32>}, {transform_indices = @transform_11, window_bounds = array<i64: 1, 4, 8, 8>}]} {
    %c0 = arith.constant 0 : index
    %c0_0 = arith.constant 0 : index
    %c0_1 = arith.constant 0 : index
    %0 = vector.load %arg1[%c0, %c0_0, %c0_1] : memref<1x8x32xf32, #tpu.memory_space<vmem>>, vector<1x8x32xf32>
    %1 = vector.shape_cast %0 : vector<1x8x32xf32> to vector<8x32xf32>
    %c0_2 = arith.constant 0 : index
    %c0_3 = arith.constant 0 : index
    %c0_4 = arith.constant 0 : index
    %2 = vector.load %arg2[%c0_2, %c0_3, %c0_4] : memref<1x8x8xf32, #tpu.memory_space<vmem>>, vector<1x8x8xf32>
    %3 = vector.shape_cast %2 : vector<1x8x8xf32> to vector<8x8xf32>
    %4 = arith.truncf %1 : vector<8x32xf32> to vector<8x32xbf16>
    %c0_5 = arith.constant 0 : index
    %c0_6 = arith.constant 0 : index
    %5 = vector.load %arg3[%c0_5, %c0_6] : memref<32x96xbf16, #tpu.memory_space<vmem>>, vector<32x96xbf16>
    %cst = arith.constant dense<0.000000e+00> : vector<8x96xf32>
    %6 = tpu.matmul %4, %5, %cst {dimension_numbers = #tpu.dot_dimension_numbers<[1], [0], [0], [1], [0, 0, 1, 1], [], []>} : vector<8x32xbf16>, vector<32x96xbf16>, vector<8x96xf32> -> vector<8x96xf32>
    %7 = vector.extract_strided_slice %6 {offsets = [0, 0], sizes = [8, 32], strides = [1, 1]} : vector<8x96xf32> to vector<8x32xf32>
    %8 = vector.extract_strided_slice %6 {offsets = [0, 32], sizes = [8, 32], strides = [1, 1]} : vector<8x96xf32> to vector<8x32xf32>
    %9 = vector.extract_strided_slice %6 {offsets = [0, 64], sizes = [8, 32], strides = [1, 1]} : vector<8x96xf32> to vector<8x32xf32>
    %10 = vector.extract_strided_slice %7 {offsets = [0, 0], sizes = [8, 8], strides = [1, 1]} : vector<8x32xf32> to vector<8x8xf32>
    %11 = vector.extract_strided_slice %7 {offsets = [0, 8], sizes = [8, 8], strides = [1, 1]} : vector<8x32xf32> to vector<8x8xf32>
    %12 = vector.extract_strided_slice %7 {offsets = [0, 16], sizes = [8, 8], strides = [1, 1]} : vector<8x32xf32> to vector<8x8xf32>
    %13 = vector.extract_strided_slice %7 {offsets = [0, 24], sizes = [8, 8], strides = [1, 1]} : vector<8x32xf32> to vector<8x8xf32>
    %14 = vector.shape_cast %10 : vector<8x8xf32> to vector<1x8x8xf32>
    %15 = vector.shape_cast %11 : vector<8x8xf32> to vector<1x8x8xf32>
    %16 = vector.shape_cast %12 : vector<8x8xf32> to vector<1x8x8xf32>
    %17 = vector.shape_cast %13 : vector<8x8xf32> to vector<1x8x8xf32>
    %18 = tpu.concatenate %14, %15, %16, %17 in 0 : vector<1x8x8xf32>, vector<1x8x8xf32>, vector<1x8x8xf32>, vector<1x8x8xf32> -> vector<4x8x8xf32>
    %19 = arith.truncf %18 : vector<4x8x8xf32> to vector<4x8x8xbf16>
    %20 = vector.extract_strided_slice %8 {offsets = [0, 0], sizes = [8, 8], strides = [1, 1]} : vector<8x32xf32> to vector<8x8xf32>
    %21 = vector.extract_strided_slice %8 {offsets = [0, 8], sizes = [8, 8], strides = [1, 1]} : vector<8x32xf32> to vector<8x8xf32>
    %22 = vector.extract_strided_slice %8 {offsets = [0, 16], sizes = [8, 8], strides = [1, 1]} : vector<8x32xf32> to vector<8x8xf32>
    %23 = vector.extract_strided_slice %8 {offsets = [0, 24], sizes = [8, 8], strides = [1, 1]} : vector<8x32xf32> to vector<8x8xf32>
    %24 = vector.shape_cast %20 : vector<8x8xf32> to vector<1x8x8xf32>
    %25 = vector.shape_cast %21 : vector<8x8xf32> to vector<1x8x8xf32>
    %26 = vector.shape_cast %22 : vector<8x8xf32> to vector<1x8x8xf32>
    %27 = vector.shape_cast %23 : vector<8x8xf32> to vector<1x8x8xf32>
    %28 = tpu.concatenate %24, %25, %26, %27 in 0 : vector<1x8x8xf32>, vector<1x8x8xf32>, vector<1x8x8xf32>, vector<1x8x8xf32> -> vector<4x8x8xf32>
    %29 = arith.truncf %28 : vector<4x8x8xf32> to vector<4x8x8xbf16>
    %30 = vector.extract_strided_slice %9 {offsets = [0, 0], sizes = [8, 8], strides = [1, 1]} : vector<8x32xf32> to vector<8x8xf32>
    %31 = vector.extract_strided_slice %9 {offsets = [0, 8], sizes = [8, 8], strides = [1, 1]} : vector<8x32xf32> to vector<8x8xf32>
    %32 = vector.extract_strided_slice %9 {offsets = [0, 16], sizes = [8, 8], strides = [1, 1]} : vector<8x32xf32> to vector<8x8xf32>
    %33 = vector.extract_strided_slice %9 {offsets = [0, 24], sizes = [8, 8], strides = [1, 1]} : vector<8x32xf32> to vector<8x8xf32>
    %34 = vector.shape_cast %30 : vector<8x8xf32> to vector<1x8x8xf32>
    %35 = vector.shape_cast %31 : vector<8x8xf32> to vector<1x8x8xf32>
    %36 = vector.shape_cast %32 : vector<8x8xf32> to vector<1x8x8xf32>
    %37 = vector.shape_cast %33 : vector<8x8xf32> to vector<1x8x8xf32>
    %38 = tpu.concatenate %34, %35, %36, %37 in 0 : vector<1x8x8xf32>, vector<1x8x8xf32>, vector<1x8x8xf32>, vector<1x8x8xf32> -> vector<4x8x8xf32>
    %39 = arith.truncf %38 : vector<4x8x8xf32> to vector<4x8x8xbf16>
    "tpu.trace_start"() <{level = 10 : i32, message = "hqd,hkd->hqk"}> : () -> ()
    %cst_7 = arith.constant dense<0.000000e+00> : vector<4x8x8xf32>
    %40 = tpu.matmul %19, %29, %cst_7 {dimension_numbers = #tpu.dot_dimension_numbers<[2], [2], [1], [1], [0, 0, 0, 1, 1, 1], [0], [0]>} : vector<4x8x8xbf16>, vector<4x8x8xbf16>, vector<4x8x8xf32> -> vector<4x8x8xf32>
    "tpu.trace_stop"() : () -> ()
    %cst_8 = arith.constant 0.353553385 : f32
    %41 = vector.broadcast %cst_8 : f32 to vector<4x8x8xf32>
    %42 = arith.mulf %40, %41 : vector<4x8x8xf32>
    %43 = vector.shape_cast %3 : vector<8x8xf32> to vector<1x8x8xf32>
    %44 = vector.broadcast %43 : vector<1x8x8xf32> to vector<4x8x8xf32>
    %45 = arith.addf %42, %44 : vector<4x8x8xf32>
    %cst_9 = arith.constant dense<0xFF800000> : vector<4x8xf32>
    %46 = vector.multi_reduction <maximumf>, %45, %cst_9 [2] : vector<4x8x8xf32> to vector<4x8xf32>
    %47 = vector.shape_cast %46 : vector<4x8xf32> to vector<4x8x1xf32>
    %48 = vector.broadcast %47 : vector<4x8x1xf32> to vector<4x8x8xf32>
    %49 = arith.subf %45, %48 : vector<4x8x8xf32>
    %50 = math.exp %49 : vector<4x8x8xf32>
    %cst_10 = arith.constant dense<0.000000e+00> : vector<4x8xf32>
    %51 = vector.multi_reduction <add>, %50, %cst_10 [2] : vector<4x8x8xf32> to vector<4x8xf32>
    %52 = vector.shape_cast %51 : vector<4x8xf32> to vector<4x8x1xf32>
    %53 = tpu.reciprocal %52 {approx = true} : vector<4x8x1xf32> -> vector<4x8x1xf32>
    %54 = vector.broadcast %53 : vector<4x8x1xf32> to vector<4x8x8xf32>
    %55 = arith.mulf %50, %54 : vector<4x8x8xf32>
    %c0_11 = arith.constant 0 : index
    %c0_12 = arith.constant 0 : index
    %c0_13 = arith.constant 0 : index
    %c0_14 = arith.constant 0 : index
    %56 = vector.load %arg12[%c0_11, %c0_12, %c0_13, %c0_14] : memref<1x4x8x8xf32, #tpu.memory_space<vmem>>, vector<1x4x8x8xf32>
    %57 = vector.shape_cast %56 : vector<1x4x8x8xf32> to vector<4x8x8xf32>
    %58 = vector.shape_cast %55 : vector<4x8x8xf32> to vector<1x4x8x8xf32>
    tpu.vector_store %arg12[%c0_11, %c0_12, %c0_13, %c0_14], %58 {strides = array<i32>} : memref<1x4x8x8xf32, #tpu.memory_space<vmem>>, vector<1x4x8x8xf32>,
    %59 = arith.truncf %55 : vector<4x8x8xf32> to vector<4x8x8xbf16>
    "tpu.trace_start"() <{level = 10 : i32, message = "hqk,hkd->hqd"}> : () -> ()
    %cst_15 = arith.constant dense<0.000000e+00> : vector<4x8x8xf32>
    %60 = tpu.matmul %59, %39, %cst_15 {dimension_numbers = #tpu.dot_dimension_numbers<[2], [1], [1], [2], [0, 0, 0, 1, 1, 2], [0], [0]>} : vector<4x8x8xbf16>, vector<4x8x8xbf16>, vector<4x8x8xf32> -> vector<4x8x8xf32>
    "tpu.trace_stop"() : () -> ()
    %61 = vector.extract_strided_slice %60 {offsets = [0, 0, 0], sizes = [1, 8, 8], strides = [1, 1, 1]} : vector<4x8x8xf32> to vector<1x8x8xf32>
    %62 = vector.shape_cast %61 : vector<1x8x8xf32> to vector<8x8xf32>
    %63 = vector.extract_strided_slice %60 {offsets = [1, 0, 0], sizes = [1, 8, 8], strides = [1, 1, 1]} : vector<4x8x8xf32> to vector<1x8x8xf32>
    %64 = vector.shape_cast %63 : vector<1x8x8xf32> to vector<8x8xf32>
    %65 = vector.extract_strided_slice %60 {offsets = [2, 0, 0], sizes = [1, 8, 8], strides = [1, 1, 1]} : vector<4x8x8xf32> to vector<1x8x8xf32>
    %66 = vector.shape_cast %65 : vector<1x8x8xf32> to vector<8x8xf32>
    %67 = vector.extract_strided_slice %60 {offsets = [3, 0, 0], sizes = [1, 8, 8], strides = [1, 1, 1]} : vector<4x8x8xf32> to vector<1x8x8xf32>
    %68 = vector.shape_cast %67 : vector<1x8x8xf32> to vector<8x8xf32>
    %69 = tpu.concatenate %62, %64, %66, %68 in 1 : vector<8x8xf32>, vector<8x8xf32>, vector<8x8xf32>, vector<8x8xf32> -> vector<8x32xf32>
    %70 = arith.truncf %69 : vector<8x32xf32> to vector<8x32xbf16>
    %c0_16 = arith.constant 0 : index
    %c0_17 = arith.constant 0 : index
    %71 = vector.load %arg4[%c0_16, %c0_17] : memref<32x32xbf16, #tpu.memory_space<vmem>>, vector<32x32xbf16>
    %cst_18 = arith.constant dense<0.000000e+00> : vector<8x32xf32>
    %72 = tpu.matmul %70, %71, %cst_18 {dimension_numbers = #tpu.dot_dimension_numbers<[1], [0], [0], [1], [0, 0, 1, 1], [], []>} : vector<8x32xbf16>, vector<32x32xbf16>, vector<8x32xf32> -> vector<8x32xf32>
    %73 = arith.addf %72, %1 : vector<8x32xf32>
    %c0_19 = arith.constant 0 : index
    %c0_20 = arith.constant 0 : index
    %74 = vector.load %arg5[%c0_19, %c0_20] : memref<1x32xf32, #tpu.memory_space<vmem>>, vector<1x32xf32>
    %c0_21 = arith.constant 0 : index
    %c0_22 = arith.constant 0 : index
    %75 = vector.load %arg6[%c0_21, %c0_22] : memref<1x32xf32, #tpu.memory_space<vmem>>, vector<1x32xf32>
    %cst_23 = arith.constant dense<0.000000e+00> : vector<8xf32>
    %76 = vector.multi_reduction <add>, %73, %cst_23 [1] : vector<8x32xf32> to vector<8xf32>
    %77 = vector.shape_cast %76 : vector<8xf32> to vector<8x1xf32>
    %cst_24 = arith.constant 3.200000e+01 : f32
    %78 = vector.broadcast %cst_24 : f32 to vector<8x1xf32>
    %79 = arith.divf %77, %78 : vector<8x1xf32>
    %80 = vector.broadcast %79 : vector<8x1xf32> to vector<8x32xf32>
    %81 = arith.subf %73, %80 : vector<8x32xf32>
    %82 = arith.mulf %81, %81 : vector<8x32xf32>
    %cst_25 = arith.constant dense<0.000000e+00> : vector<8xf32>
    %83 = vector.multi_reduction <add>, %82, %cst_25 [1] : vector<8x32xf32> to vector<8xf32>
    %84 = vector.shape_cast %83 : vector<8xf32> to vector<8x1xf32>
    %cst_26 = arith.constant 3.200000e+01 : f32
    %85 = vector.broadcast %cst_26 : f32 to vector<8x1xf32>
    %86 = arith.divf %84, %85 : vector<8x1xf32>
    %87 = vector.broadcast %79 : vector<8x1xf32> to vector<8x32xf32>
    %88 = arith.subf %73, %87 : vector<8x32xf32>
    %cst_27 = arith.constant 9.99999974E-6 : f32
    %89 = vector.broadcast %cst_27 : f32 to vector<8x1xf32>
    %90 = arith.addf %86, %89 : vector<8x1xf32>
    %91 = math.rsqrt %90 : vector<8x1xf32>
    %92 = vector.broadcast %91 : vector<8x1xf32> to vector<8x32xf32>
    %93 = arith.mulf %88, %92 : vector<8x32xf32>
    %94 = vector.broadcast %74 : vector<1x32xf32> to vector<8x32xf32>
    %95 = arith.mulf %93, %94 : vector<8x32xf32>
    %96 = vector.broadcast %75 : vector<1x32xf32> to vector<8x32xf32>
    %97 = arith.addf %95, %96 : vector<8x32xf32>
    %98 = arith.truncf %97 : vector<8x32xf32> to vector<8x32xbf16>
    %c0_28 = arith.constant 0 : index
    %c0_29 = arith.constant 0 : index
    %99 = vector.load %arg7[%c0_28, %c0_29] : memref<32x64xbf16, #tpu.memory_space<vmem>>, vector<32x64xbf16>
    %cst_30 = arith.constant dense<0.000000e+00> : vector<8x64xf32>
    %100 = tpu.matmul %98, %99, %cst_30 {dimension_numbers = #tpu.dot_dimension_numbers<[1], [0], [0], [1], [0, 0, 1, 1], [], []>} : vector<8x32xbf16>, vector<32x64xbf16>, vector<8x64xf32> -> vector<8x64xf32>
    %cst_31 = arith.constant 0.000000e+00 : f32
    %101 = vector.broadcast %cst_31 : f32 to vector<8x64xf32>
    %102 = arith.maximumf %100, %101 : vector<8x64xf32>
    %103 = arith.truncf %102 : vector<8x64xf32> to vector<8x64xbf16>
    %c0_32 = arith.constant 0 : index
    %c0_33 = arith.constant 0 : index
    %104 = vector.load %arg8[%c0_32, %c0_33] : memref<64x32xbf16, #tpu.memory_space<vmem>>, vector<64x32xbf16>
    %cst_34 = arith.constant dense<0.000000e+00> : vector<8x32xf32>
    %105 = tpu.matmul %103, %104, %cst_34 {dimension_numbers = #tpu.dot_dimension_numbers<[1], [0], [0], [1], [0, 0, 1, 1], [], []>} : vector<8x64xbf16>, vector<64x32xbf16>, vector<8x32xf32> -> vector<8x32xf32>
    %106 = arith.addf %105, %97 : vector<8x32xf32>
    %c0_35 = arith.constant 0 : index
    %c0_36 = arith.constant 0 : index
    %107 = vector.load %arg9[%c0_35, %c0_36] : memref<1x32xf32, #tpu.memory_space<vmem>>, vector<1x32xf32>
    %c0_37 = arith.constant 0 : index
    %c0_38 = arith.constant 0 : index
    %108 = vector.load %arg10[%c0_37, %c0_38] : memref<1x32xf32, #tpu.memory_space<vmem>>, vector<1x32xf32>
    %cst_39 = arith.constant dense<0.000000e+00> : vector<8xf32>
    %109 = vector.multi_reduction <add>, %106, %cst_39 [1] : vector<8x32xf32> to vector<8xf32>
    %110 = vector.shape_cast %109 : vector<8xf32> to vector<8x1xf32>
    %cst_40 = arith.constant 3.200000e+01 : f32
    %111 = vector.broadcast %cst_40 : f32 to vector<8x1xf32>
    %112 = arith.divf %110, %111 : vector<8x1xf32>
    %113 = vector.broadcast %112 : vector<8x1xf32> to vector<8x32xf32>
    %114 = arith.subf %106, %113 : vector<8x32xf32>
    %115 = arith.mulf %114, %114 : vector<8x32xf32>
    %cst_41 = arith.constant dense<0.000000e+00> : vector<8xf32>
    %116 = vector.multi_reduction <add>, %115, %cst_41 [1] : vector<8x32xf32> to vector<8xf32>
    %117 = vector.shape_cast %116 : vector<8xf32> to vector<8x1xf32>
    %cst_42 = arith.constant 3.200000e+01 : f32
    %118 = vector.broadcast %cst_42 : f32 to vector<8x1xf32>
    %119 = arith.divf %117, %118 : vector<8x1xf32>
    %120 = vector.broadcast %112 : vector<8x1xf32> to vector<8x32xf32>
    %121 = arith.subf %106, %120 : vector<8x32xf32>
    %cst_43 = arith.constant 9.99999974E-6 : f32
    %122 = vector.broadcast %cst_43 : f32 to vector<8x1xf32>
    %123 = arith.addf %119, %122 : vector<8x1xf32>
    %124 = math.rsqrt %123 : vector<8x1xf32>
    %125 = vector.broadcast %124 : vector<8x1xf32> to vector<8x32xf32>
    %126 = arith.mulf %121, %125 : vector<8x32xf32>
    %127 = vector.broadcast %107 : vector<1x32xf32> to vector<8x32xf32>
    %128 = arith.mulf %126, %127 : vector<8x32xf32>
    %129 = vector.broadcast %108 : vector<1x32xf32> to vector<8x32xf32>
    %130 = arith.addf %128, %129 : vector<8x32xf32>
    %c0_44 = arith.constant 0 : index
    %c0_45 = arith.constant 0 : index
    %c0_46 = arith.constant 0 : index
    %131 = vector.load %arg11[%c0_44, %c0_45, %c0_46] : memref<1x8x32xf32, #tpu.memory_space<vmem>>, vector<1x8x32xf32>
    %132 = vector.shape_cast %131 : vector<1x8x32xf32> to vector<8x32xf32>
    %133 = vector.shape_cast %130 : vector<8x32xf32> to vector<1x8x32xf32>
    tpu.vector_store %arg11[%c0_44, %c0_45, %c0_46], %133 {strides = array<i32>} : memref<1x8x32xf32, #tpu.memory_space<vmem>>, vector<1x8x32xf32>,
    return
  }
  func.func @transform_0(%arg0: i32) -> (i32, i32, i32) {
    %c0_i32 = arith.constant 0 : i32
    %c0_i32_0 = arith.constant 0 : i32
    %c0_i32_1 = arith.constant 0 : i32
    return %arg0, %c0_i32, %c0_i32_0 : i32, i32, i32
  }
  func.func @transform_1(%arg0: i32) -> (i32, i32, i32) {
    %c0_i32 = arith.constant 0 : i32
    %c0_i32_0 = arith.constant 0 : i32
    %c0_i32_1 = arith.constant 0 : i32
    return %arg0, %c0_i32, %c0_i32_0 : i32, i32, i32
  }
  func.func @transform_2(%arg0: i32) -> (i32, i32) {
    %c0_i32 = arith.constant 0 : i32
    %c0_i32_0 = arith.constant 0 : i32
    %c0_i32_1 = arith.constant 0 : i32
    return %c0_i32, %c0_i32_0 : i32, i32
  }
  func.func @transform_3(%arg0: i32) -> (i32, i32) {
    %c0_i32 = arith.constant 0 : i32
    %c0_i32_0 = arith.constant 0 : i32
    %c0_i32_1 = arith.constant 0 : i32
    return %c0_i32, %c0_i32_0 : i32, i32
  }
  func.func @transform_4(%arg0: i32) -> (i32, i32) {
    %c0_i32 = arith.constant 0 : i32
    %c0_i32_0 = arith.constant 0 : i32
    %c0_i32_1 = arith.constant 0 : i32
    return %c0_i32, %c0_i32_0 : i32, i32
  }
  func.func @transform_5(%arg0: i32) -> (i32, i32) {
    %c0_i32 = arith.constant 0 : i32
    %c0_i32_0 = arith.constant 0 : i32
    %c0_i32_1 = arith.constant 0 : i32
    return %c0_i32, %c0_i32_0 : i32, i32
  }
  func.func @transform_6(%arg0: i32) -> (i32, i32) {
    %c0_i32 = arith.constant 0 : i32
    %c0_i32_0 = arith.constant 0 : i32
    %c0_i32_1 = arith.constant 0 : i32
    return %c0_i32, %c0_i32_0 : i32, i32
  }
  func.func @transform_7(%arg0: i32) -> (i32, i32) {
    %c0_i32 = arith.constant 0 : i32
    %c0_i32_0 = arith.constant 0 : i32
    %c0_i32_1 = arith.constant 0 : i32
    return %c0_i32, %c0_i32_0 : i32, i32
  }
  func.func @transform_8(%arg0: i32) -> (i32, i32) {
    %c0_i32 = arith.constant 0 : i32
    %c0_i32_0 = arith.constant 0 : i32
    %c0_i32_1 = arith.constant 0 : i32
    return %c0_i32, %c0_i32_0 : i32, i32
  }
  func.func @transform_9(%arg0: i32) -> (i32, i32) {
    %c0_i32 = arith.constant 0 : i32
    %c0_i32_0 = arith.constant 0 : i32
    %c0_i32_1 = arith.constant 0 : i32
    return %c0_i32, %c0_i32_0 : i32, i32
  }
  func.func @transform_10(%arg0: i32) -> (i32, i32, i32) {
    %c0_i32 = arith.constant 0 : i32
    %c0_i32_0 = arith.constant 0 : i32
    %c0_i32_1 = arith.constant 0 : i32
    return %arg0, %c0_i32, %c0_i32_0 : i32, i32, i32
  }
  func.func @transform_11(%arg0: i32) -> (i32, i32, i32, i32) {
    %c0_i32 = arith.constant 0 : i32
    %c0_i32_0 = arith.constant 0 : i32
    %c0_i32_1 = arith.constant 0 : i32
    %c0_i32_2 = arith.constant 0 : i32
    return %arg0, %c0_i32, %c0_i32_0, %c0_i32_1 : i32, i32, i32, i32
  }
}

</mosaic_0001>

<llo_original>
// kernel: tpu_custom_call.1
$region0: #{tpu_custom_call.1}
  #allocation0 [shape = 'u32[]', space=smem, size = 0x4, offset = 0x4, fixed_abs, tag = 'smem constant byte address 0x4 - core index']
  #allocation1 [shape = 'u32[144,128]{1,0:T(1,128)}', space=vmem, size = 0x12000, scoped, tag = 'internal scratch']
  %s0 = inlined_call_operand.vmem [shape: f32[2,8,32], index: 0, kind: input, shape index: {}]
  %s1 = inlined_call_operand.vmem [shape: f32[2,8,8], index: 1, kind: input, shape index: {}]
  %s2 = inlined_call_operand.vmem [shape: bf16[32,96], index: 2, kind: input, shape index: {}]
  %s3 = inlined_call_operand.hbm [shape: bf16[32,32], index: 3, kind: input, shape index: {}]
  %s4 = inlined_call_operand.vmem [shape: f32[1,32], index: 4, kind: input, shape index: {}]
  %s5 = inlined_call_operand.vmem [shape: f32[1,32], index: 5, kind: input, shape index: {}]
  %s6 = inlined_call_operand.hbm [shape: bf16[32,64], index: 6, kind: input, shape index: {}]
  %s7 = inlined_call_operand.vmem [shape: bf16[64,32], index: 7, kind: input, shape index: {}]
  %s8 = inlined_call_operand.vmem [shape: f32[1,32], index: 8, kind: input, shape index: {}]
  %s9 = inlined_call_operand.vmem [shape: f32[1,32], index: 9, kind: input, shape index: {}]
  %s10 = inlined_call_operand.hbm [shape: f32[2,8,32], index: 10, kind: output, shape index: {0}]
  %s11 = inlined_call_operand.hbm [shape: f32[2,4,8,8], index: 11, kind: output, shape index: {1}]
  %12 = xla_tuple %s10, %s11
  %s13 = sld [smem:[#allocation0]]
  $region89: #{tpu_custom_call.1} parent=0
    _
  %s15 = ssub.s32 1, %s13
  %s16 = scalar_select 0, %s15, %s13
  $region1: #{tpu_custom_call.1} parent=0
    #allocation2 [shape = 'u8[8192]{0}', space=vmem, size = 0x2000, scoped, tag = 'input window, operand 3, single buffered']
    #allocation3 [shape = 's32[2]{0}', space=sflag, size = 0x8, scoped, tag = 'scoped memory for tpu_custom_call.1']
    #allocation4 [shape = 's32[2]{0}', space=sflag, size = 0x8, scoped, tag = 'scoped memory for tpu_custom_call.1']
    #allocation5 [shape = 'u8[8192]{0}', space=vmem, size = 0x2000, scoped, tag = 'input window, operand 6, single buffered']
    #allocation6 [shape = 's32[1]{0}', space=sflag, size = 0x4, scoped, tag = 'scoped memory for tpu_custom_call.1']
    #allocation7 [shape = 'u8[8192]{0}', space=vmem, size = 0x2000, scoped, tag = 'output window, operand 0']
    #allocation8 [shape = 'u8[32768]{0}', space=vmem, size = 0x8000, scoped, tag = 'output window, operand 1']
    #allocation9 [shape = 's32[2]{0}', space=sflag, size = 0x8, scoped, tag = 'scoped memory for tpu_custom_call.1']
    %17 = vsyncpa [#allocation3], 0
    %18 = vsyncpa [#allocation6], 0
    %19 = vsyncpa [#allocation4], 0
    %s20 = scalar_lea.sflag [#allocation4], 1
    %21 = vsyncpa %s20, 0
    %22 = vsyncpa [#allocation9], 0
    %s23 = scalar_lea.sflag [#allocation9], 1
    %24 = vsyncpa %s23, 0
    loop: start=0, step=1, limit=4
    $region2: #{tpu_custom_call.1} parent=1 // loop_pre_header
      _
    $region3: #{tpu_custom_call.1} parent=1 // loop_header
      %s26 = sphi 0, %s30
      %p27 = scmp.ge.s32.totalorder %s26, 4
      %s36 = sphi 0, %s38
      %s39 = sphi 0, %s36
      %s40 = sphi 0, %s39
      %s56 = sphi 0, %s40
      %s62 = sphi 0, %s64
      %s65 = sphi 0, %s62
      %s66 = sphi 0, %s65
      %s82 = sphi 0, %s66
      %s86 = sphi 0, %s86
      %s88 = sphi 0, %s86
      %s89 = sphi 0, %s88
      %s103 = sphi 0, %s89
      %s107 = sphi 0, %s107
      %s109 = sphi 0, %s107
      %s110 = sphi 0, %s109
      %s124 = sphi 0, %s110
      %s128 = sphi 0, %s128
      %s130 = sphi 0, %s128
      %s131 = sphi 0, %s130
      %s145 = sphi 0, %s131
      %s149 = sphi 0, %s149
      %s151 = sphi 0, %s149
      %s152 = sphi 0, %s151
      %s166 = sphi 0, %s152
      %s170 = sphi 0, %s170
      %s172 = sphi 0, %s170
      %s173 = sphi 0, %s172
      %s187 = sphi 0, %s173
      %s191 = sphi 0, %s191
      %s193 = sphi 0, %s191
      %s194 = sphi 0, %s193
      %s208 = sphi 0, %s194
      %s212 = sphi 0, %s212
      %s214 = sphi 0, %s212
      %s215 = sphi 0, %s214
      %s229 = sphi 0, %s215
      %s233 = sphi 0, %s233
      %s235 = sphi 0, %s233
      %s236 = sphi 0, %s235
      %s250 = sphi 0, %s236
      %s256 = sphi 0, %s258
      %s259 = sphi 0, %s256
      %s260 = sphi 0, %s259
      %s276 = sphi 0, %s260
      %s282 = sphi 0, %s284
      %s285 = sphi 0, %s282
      %s286 = sphi 0, %s285
      %s302 = sphi 0, %s286
    $region4: #{tpu_custom_call.1} parent=1 // loop_header_branch
      %29 = sbr.rel (%p27) target = $region8
    $region5: #{tpu_custom_call.1} parent=1 // loop_body
      %s31 = ssub.s32 %s26, 1
      %s32 = ssub.s32 %s26, 2
      %s33 = sadd.s32 %s26, 1
      %s34 = ssub.s32 %s26, %s33
      %p35 = scmp.eq.s32.totalorder %s34, 0
      %s37 = sadd.s32 %s36, 1
      %s38 = scalar_select %p35, %s36, %s37
      %p41 = pneg %p35
      %p42 = scmp.eq.s32.totalorder %s26, 1
      %p43 = por %p41, %p42
      %p44 = scmp.ne.s32.totalorder %s36, %s39
      %p45 = scmp.eq.s32.totalorder %s26, 0
      %p46 = por %p44, %p45
      %p47 = scmp.ne.s32.totalorder %s36, %s39
      %p48 = scmp.eq.s32.totalorder %s31, 1
      %p49 = por %p47, %p48
      %p50 = scmp.ne.s32.totalorder %s39, %s40
      %p51 = scmp.eq.s32.totalorder %s31, 0
      %p52 = por %p50, %p51
      %p53 = scmp.ne.s32.totalorder %s39, %s40
      %p54 = scmp.eq.s32.totalorder %s32, 1
      %p55 = por %p53, %p54
      %p57 = scmp.ne.s32.totalorder %s40, %s56
      %p58 = scmp.eq.s32.totalorder %s32, 0
      %p59 = por %p57, %p58
      %s60 = ssub.s32 %s26, %s33
      %p61 = scmp.eq.s32.totalorder %s60, 0
      %s63 = sadd.s32 %s62, 1
      %s64 = scalar_select %p61, %s62, %s63
      %p67 = pneg %p61
      %p68 = scmp.eq.s32.totalorder %s26, 1
      %p69 = por %p67, %p68
      %p70 = scmp.ne.s32.totalorder %s62, %s65
      %p71 = scmp.eq.s32.totalorder %s26, 0
      %p72 = por %p70, %p71
      %p73 = scmp.ne.s32.totalorder %s62, %s65
      %p74 = scmp.eq.s32.totalorder %s31, 1
      %p75 = por %p73, %p74
      %p76 = scmp.ne.s32.totalorder %s65, %s66
      %p77 = scmp.eq.s32.totalorder %s31, 0
      %p78 = por %p76, %p77
      %p79 = scmp.ne.s32.totalorder %s65, %s66
      %p80 = scmp.eq.s32.totalorder %s32, 1
      %p81 = por %p79, %p80
      %p83 = scmp.ne.s32.totalorder %s66, %s82
      %p84 = scmp.eq.s32.totalorder %s32, 0
      %p85 = por %p83, %p84
      %s87 = sadd.s32 %s86, 1
      %p90 = scmp.eq.s32.totalorder %s26, 1
      %p91 = scmp.ne.s32.totalorder %s86, %s88
      %p92 = scmp.eq.s32.totalorder %s26, 0
      %p93 = por %p91, %p92
      %p94 = scmp.ne.s32.totalorder %s86, %s88
      %p95 = scmp.eq.s32.totalorder %s31, 1
      %p96 = por %p94, %p95
      %p97 = scmp.ne.s32.totalorder %s88, %s89
      %p98 = scmp.eq.s32.totalorder %s31, 0
      %p99 = por %p97, %p98
      %p100 = scmp.ne.s32.totalorder %s88, %s89
      %p101 = scmp.eq.s32.totalorder %s32, 1
      %p102 = por %p100, %p101
      %p104 = scmp.ne.s32.totalorder %s89, %s103
      %p105 = scmp.eq.s32.totalorder %s32, 0
      %p106 = por %p104, %p105
      %s108 = sadd.s32 %s107, 1
      %p111 = scmp.eq.s32.totalorder %s26, 1
      %p112 = scmp.ne.s32.totalorder %s107, %s109
      %p113 = scmp.eq.s32.totalorder %s26, 0
      %p114 = por %p112, %p113
      %p115 = scmp.ne.s32.totalorder %s107, %s109
      %p116 = scmp.eq.s32.totalorder %s31, 1
      %p117 = por %p115, %p116
      %p118 = scmp.ne.s32.totalorder %s109, %s110
      %p119 = scmp.eq.s32.totalorder %s31, 0
      %p120 = por %p118, %p119
      %p121 = scmp.ne.s32.totalorder %s109, %s110
      %p122 = scmp.eq.s32.totalorder %s32, 1
      %p123 = por %p121, %p122
      %p125 = scmp.ne.s32.totalorder %s110, %s124
      %p126 = scmp.eq.s32.totalorder %s32, 0
      %p127 = por %p125, %p126
      %s129 = sadd.s32 %s128, 1
      %p132 = scmp.eq.s32.totalorder %s26, 1
      %p133 = scmp.ne.s32.totalorder %s128, %s130
      %p134 = scmp.eq.s32.totalorder %s26, 0
      %p135 = por %p133, %p134
      %p136 = scmp.ne.s32.totalorder %s128, %s130
      %p137 = scmp.eq.s32.totalorder %s31, 1
      %p138 = por %p136, %p137
      %p139 = scmp.ne.s32.totalorder %s130, %s131
      %p140 = scmp.eq.s32.totalorder %s31, 0
      %p141 = por %p139, %p140
      %p142 = scmp.ne.s32.totalorder %s130, %s131
      %p143 = scmp.eq.s32.totalorder %s32, 1
      %p144 = por %p142, %p143
      %p146 = scmp.ne.s32.totalorder %s131, %s145
      %p147 = scmp.eq.s32.totalorder %s32, 0
      %p148 = por %p146, %p147
      %s150 = sadd.s32 %s149, 1
      %p153 = scmp.eq.s32.totalorder %s26, 1
      %p154 = scmp.ne.s32.totalorder %s149, %s151
      %p155 = scmp.eq.s32.totalorder %s26, 0
      %p156 = por %p154, %p155
      %p157 = scmp.ne.s32.totalorder %s149, %s151
      %p158 = scmp.eq.s32.totalorder %s31, 1
      %p159 = por %p157, %p158
      %p160 = scmp.ne.s32.totalorder %s151, %s152
      %p161 = scmp.eq.s32.totalorder %s31, 0
      %p162 = por %p160, %p161
      %p163 = scmp.ne.s32.totalorder %s151, %s152
      %p164 = scmp.eq.s32.totalorder %s32, 1
      %p165 = por %p163, %p164
      %p167 = scmp.ne.s32.totalorder %s152, %s166
      %p168 = scmp.eq.s32.totalorder %s32, 0
      %p169 = por %p167, %p168
      %s171 = sadd.s32 %s170, 1
      %p174 = scmp.eq.s32.totalorder %s26, 1
      %p175 = scmp.ne.s32.totalorder %s170, %s172
      %p176 = scmp.eq.s32.totalorder %s26, 0
      %p177 = por %p175, %p176
      %p178 = scmp.ne.s32.totalorder %s170, %s172
      %p179 = scmp.eq.s32.totalorder %s31, 1
      %p180 = por %p178, %p179
      %p181 = scmp.ne.s32.totalorder %s172, %s173
      %p182 = scmp.eq.s32.totalorder %s31, 0
      %p183 = por %p181, %p182
      %p184 = scmp.ne.s32.totalorder %s172, %s173
      %p185 = scmp.eq.s32.totalorder %s32, 1
      %p186 = por %p184, %p185
      %p188 = scmp.ne.s32.totalorder %s173, %s187
      %p189 = scmp.eq.s32.totalorder %s32, 0
      %p190 = por %p188, %p189
      %s192 = sadd.s32 %s191, 1
      %p195 = scmp.eq.s32.totalorder %s26, 1
      %p196 = scmp.ne.s32.totalorder %s191, %s193
      %p197 = scmp.eq.s32.totalorder %s26, 0
      %p198 = por %p196, %p197
      %p199 = scmp.ne.s32.totalorder %s191, %s193
      %p200 = scmp.eq.s32.totalorder %s31, 1
      %p201 = por %p199, %p200
      %p202 = scmp.ne.s32.totalorder %s193, %s194
      %p203 = scmp.eq.s32.totalorder %s31, 0
      %p204 = por %p202, %p203
      %p205 = scmp.ne.s32.totalorder %s193, %s194
      %p206 = scmp.eq.s32.totalorder %s32, 1
      %p207 = por %p205, %p206
      %p209 = scmp.ne.s32.totalorder %s194, %s208
      %p210 = scmp.eq.s32.totalorder %s32, 0
      %p211 = por %p209, %p210
      %s213 = sadd.s32 %s212, 1
      %p216 = scmp.eq.s32.totalorder %s26, 1
      %p217 = scmp.ne.s32.totalorder %s212, %s214
      %p218 = scmp.eq.s32.totalorder %s26, 0
      %p219 = por %p217, %p218
      %p220 = scmp.ne.s32.totalorder %s212, %s214
      %p221 = scmp.eq.s32.totalorder %s31, 1
      %p222 = por %p220, %p221
      %p223 = scmp.ne.s32.totalorder %s214, %s215
      %p224 = scmp.eq.s32.totalorder %s31, 0
      %p225 = por %p223, %p224
      %p226 = scmp.ne.s32.totalorder %s214, %s215
      %p227 = scmp.eq.s32.totalorder %s32, 1
      %p228 = por %p226, %p227
      %p230 = scmp.ne.s32.totalorder %s215, %s229
      %p231 = scmp.eq.s32.totalorder %s32, 0
      %p232 = por %p230, %p231
      %s234 = sadd.s32 %s233, 1
      %p237 = scmp.eq.s32.totalorder %s26, 1
      %p238 = scmp.ne.s32.totalorder %s233, %s235
      %p239 = scmp.eq.s32.totalorder %s26, 0
      %p240 = por %p238, %p239
      %p241 = scmp.ne.s32.totalorder %s233, %s235
      %p242 = scmp.eq.s32.totalorder %s31, 1
      %p243 = por %p241, %p242
      %p244 = scmp.ne.s32.totalorder %s235, %s236
      %p245 = scmp.eq.s32.totalorder %s31, 0
      %p246 = por %p244, %p245
      %p247 = scmp.ne.s32.totalorder %s235, %s236
      %p248 = scmp.eq.s32.totalorder %s32, 1
      %p249 = por %p247, %p248
      %p251 = scmp.ne.s32.totalorder %s236, %s250
      %p252 = scmp.eq.s32.totalorder %s32, 0
      %p253 = por %p251, %p252
      %s254 = ssub.s32 %s26, %s33
      %p255 = scmp.eq.s32.totalorder %s254, 0
      %s257 = sadd.s32 %s256, 1
      %s258 = scalar_select %p255, %s256, %s257
      %p261 = pneg %p255
      %p262 = scmp.eq.s32.totalorder %s26, 1
      %p263 = por %p261, %p262
      %p264 = scmp.ne.s32.totalorder %s256, %s259
      %p265 = scmp.eq.s32.totalorder %s26, 0
      %p266 = por %p264, %p265
      %p267 = scmp.ne.s32.totalorder %s256, %s259
      %p268 = scmp.eq.s32.totalorder %s31, 1
      %p269 = por %p267, %p268
      %p270 = scmp.ne.s32.totalorder %s259, %s260
      %p271 = scmp.eq.s32.totalorder %s31, 0
      %p272 = por %p270, %p271
      %p273 = scmp.ne.s32.totalorder %s259, %s260
      %p274 = scmp.eq.s32.totalorder %s32, 1
      %p275 = por %p273, %p274
      %p277 = scmp.ne.s32.totalorder %s260, %s276
      %p278 = scmp.eq.s32.totalorder %s32, 0
      %p279 = por %p277, %p278
      %s280 = ssub.s32 %s26, %s33
      %p281 = scmp.eq.s32.totalorder %s280, 0
      %s283 = sadd.s32 %s282, 1
      %s284 = scalar_select %p281, %s282, %s283
      %p287 = pneg %p281
      %p288 = scmp.eq.s32.totalorder %s26, 1
      %p289 = por %p287, %p288
      %p290 = scmp.ne.s32.totalorder %s282, %s285
      %p291 = scmp.eq.s32.totalorder %s26, 0
      %p292 = por %p290, %p291
      %p293 = scmp.ne.s32.totalorder %s282, %s285
      %p294 = scmp.eq.s32.totalorder %s31, 1
      %p295 = por %p293, %p294
      %p296 = scmp.ne.s32.totalorder %s285, %s286
      %p297 = scmp.eq.s32.totalorder %s31, 0
      %p298 = por %p296, %p297
      %p299 = scmp.ne.s32.totalorder %s285, %s286
      %p300 = scmp.eq.s32.totalorder %s32, 1
      %p301 = por %p299, %p300
      %p303 = scmp.ne.s32.totalorder %s286, %s302
      %p304 = scmp.eq.s32.totalorder %s32, 0
      %p305 = por %p303, %p304
      %p306 = scmp.le.s32.totalorder 1, %s26
      %p307 = scmp.lt.s32.totalorder %s26, 3
      %p308 = pnand %p306, %p307
      %p309 = pneg %p308
      // Predicated region
      $region9: #{tpu_custom_call.1} parent=5 // pred_check
        _
      $region10: #{tpu_custom_call.1} parent=5 // pred_check_branch
        %311 = sbr.rel (%p308) target = $region12
      $region11: #{tpu_custom_call.1} parent=5 // pred_region
        %s312 = ssub.s32 %s26, 1
        // Predicated region
        $region13: #{tpu_custom_call.1} parent=11 // pred_check
          %p313 = pneg %p99
        $region14: #{tpu_custom_call.1} parent=11 // pred_check_branch
          %315 = sbr.rel (%p313) target = $region16
        $region15: #{tpu_custom_call.1} parent=11 // pred_region
          _
        $region16: #{tpu_custom_call.1} parent=11 // pred_fallthru
          _
        // Predicated region
        $region17: #{tpu_custom_call.1} parent=11 // pred_check
          %p316 = pneg %p120
        $region18: #{tpu_custom_call.1} parent=11 // pred_check_branch
          %318 = sbr.rel (%p316) target = $region20
        $region19: #{tpu_custom_call.1} parent=11 // pred_region
          %s320 = ssub.s32 256, 256
          %321 = vsyncadd [#allocation3], %s320
          %s322 = sshll.u32 [#allocation2], 4
          %s323 = int_to_ptr.vmem [resolvable:$true] %s322
          %328 = dma.hbm_to_vmem [thread:$0]  %s3, 256, %s323, [#allocation3], 64, 64, 4
        $region20: #{tpu_custom_call.1} parent=11 // pred_fallthru
          _
        // Predicated region
        $region21: #{tpu_custom_call.1} parent=11 // pred_check
          %p329 = pneg %p141
        $region22: #{tpu_custom_call.1} parent=11 // pred_check_branch
          %331 = sbr.rel (%p329) target = $region24
        $region23: #{tpu_custom_call.1} parent=11 // pred_region
          _
        $region24: #{tpu_custom_call.1} parent=11 // pred_fallthru
          _
        // Predicated region
        $region25: #{tpu_custom_call.1} parent=11 // pred_check
          %p332 = pneg %p162
        $region26: #{tpu_custom_call.1} parent=11 // pred_check_branch
          %334 = sbr.rel (%p332) target = $region28
        $region27: #{tpu_custom_call.1} parent=11 // pred_region
          _
        $region28: #{tpu_custom_call.1} parent=11 // pred_fallthru
          _
        // Predicated region
        $region29: #{tpu_custom_call.1} parent=11 // pred_check
          %p335 = pneg %p183
        $region30: #{tpu_custom_call.1} parent=11 // pred_check_branch
          %337 = sbr.rel (%p335) target = $region32
        $region31: #{tpu_custom_call.1} parent=11 // pred_region
          %s339 = ssub.s32 256, 256
          %340 = vsyncadd [#allocation6], %s339
          %s341 = sshll.u32 [#allocation5], 4
          %s342 = int_to_ptr.vmem [resolvable:$true] %s341
          %347 = dma.hbm_to_vmem [thread:$0]  %s6, 256, %s342, [#allocation6], 64, 64, 4
        $region32: #{tpu_custom_call.1} parent=11 // pred_fallthru
          _
        // Predicated region
        $region33: #{tpu_custom_call.1} parent=11 // pred_check
          %p348 = pneg %p204
        $region34: #{tpu_custom_call.1} parent=11 // pred_check_branch
          %350 = sbr.rel (%p348) target = $region36
        $region35: #{tpu_custom_call.1} parent=11 // pred_region
          _
        $region36: #{tpu_custom_call.1} parent=11 // pred_fallthru
          _
        // Predicated region
        $region37: #{tpu_custom_call.1} parent=11 // pred_check
          %p351 = pneg %p225
        $region38: #{tpu_custom_call.1} parent=11 // pred_check_branch
          %353 = sbr.rel (%p351) target = $region40
        $region39: #{tpu_custom_call.1} parent=11 // pred_region
          _
        $region40: #{tpu_custom_call.1} parent=11 // pred_fallthru
          _
        // Predicated region
        $region41: #{tpu_custom_call.1} parent=11 // pred_check
          %p354 = pneg %p246
        $region42: #{tpu_custom_call.1} parent=11 // pred_check_branch
          %356 = sbr.rel (%p354) target = $region44
        $region43: #{tpu_custom_call.1} parent=11 // pred_region
          _
        $region44: #{tpu_custom_call.1} parent=11 // pred_fallthru
          _
      $region12: #{tpu_custom_call.1} parent=5 // pred_fallthru
        _
      %p357 = scmp.lt.s32.totalorder %s26, 2
      // Predicated region
      $region45: #{tpu_custom_call.1} parent=5 // pred_check
        %p358 = pneg %p357
      $region46: #{tpu_custom_call.1} parent=5 // pred_check_branch
        %360 = sbr.rel (%p358) target = $region48
      $region47: #{tpu_custom_call.1} parent=5 // pred_region
        // Predicated region
        $region49: #{tpu_custom_call.1} parent=47 // pred_check
          %p361 = pneg %p46
        $region50: #{tpu_custom_call.1} parent=47 // pred_check_branch
          %363 = sbr.rel (%p361) target = $region52
        $region51: #{tpu_custom_call.1} parent=47 // pred_region
          %p364 = scmp.lt.s32.totalorder %s26, 1
          %s365 = scalar_select %p364, %s26, 1
          %s366 = smul.addr %s365, 8
          %s367 = scalar_lea.vmem %s0, %s366
        $region52: #{tpu_custom_call.1} parent=47 // pred_fallthru
          _
        // Predicated region
        $region53: #{tpu_custom_call.1} parent=47 // pred_check
          %p368 = pneg %p72
        $region54: #{tpu_custom_call.1} parent=47 // pred_check_branch
          %370 = sbr.rel (%p368) target = $region56
        $region55: #{tpu_custom_call.1} parent=47 // pred_region
          %p371 = scmp.lt.s32.totalorder %s26, 1
          %s372 = scalar_select %p371, %s26, 1
          %s373 = smul.addr %s372, 8
          %s374 = scalar_lea.vmem %s1, %s373
        $region56: #{tpu_custom_call.1} parent=47 // pred_fallthru
          _
      $region48: #{tpu_custom_call.1} parent=5 // pred_fallthru
        _
      %p375 = scmp.le.s32.totalorder 1, %s26
      %p376 = scmp.lt.s32.totalorder %s26, 3
      %p377 = pnand %p375, %p376
      %p378 = pneg %p377
      // Predicated region
      $region57: #{tpu_custom_call.1} parent=5 // pred_check
        _
      $region58: #{tpu_custom_call.1} parent=5 // pred_check_branch
        %380 = sbr.rel (%p377) target = $region60
      $region59: #{tpu_custom_call.1} parent=5 // pred_region
        %s381 = ssub.s32 %s26, 1
        // Predicated region
        $region61: #{tpu_custom_call.1} parent=59 // pred_check
          %p382 = pneg %p120
        $region62: #{tpu_custom_call.1} parent=59 // pred_check_branch
          %384 = sbr.rel (%p382) target = $region64
        $region63: #{tpu_custom_call.1} parent=59 // pred_region
          %385 = dma.done [#allocation3], 256
        $region64: #{tpu_custom_call.1} parent=59 // pred_fallthru
          _
        // Predicated region
        $region65: #{tpu_custom_call.1} parent=59 // pred_check
          %p386 = pneg %p183
        $region66: #{tpu_custom_call.1} parent=59 // pred_check_branch
          %388 = sbr.rel (%p386) target = $region68
        $region67: #{tpu_custom_call.1} parent=59 // pred_region
          %389 = dma.done [#allocation6], 256
        $region68: #{tpu_custom_call.1} parent=59 // pred_fallthru
          _
        %p390 = scmp.lt.s32.totalorder %s31, 1
        %s391 = scalar_select %p390, %s31, 1
        %s392 = smul.addr %s391, 8
        %s393 = scalar_lea.vmem %s0, %s392
        %p394 = pneg %p52
        %p395 = pneg %p49
        %p396 = scmp.lt.s32.totalorder %s31, 1
        %s397 = scalar_select %p396, %s31, 1
        %s398 = smul.addr %s397, 8
        %s399 = scalar_lea.vmem %s1, %s398
        %p400 = pneg %p78
        %p401 = pneg %p75
        %p402 = pneg %p99
        %p403 = pneg %p96
        %p404 = pneg %p120
        %p405 = pneg %p117
        %p406 = pneg %p141
        %p407 = pneg %p138
        %p408 = pneg %p162
        %p409 = pneg %p159
        %p410 = pneg %p183
        %p411 = pneg %p180
        %p412 = pneg %p204
        %p413 = pneg %p201
        %p414 = pneg %p225
        %p415 = pneg %p222
        %p416 = pneg %p246
        %p417 = pneg %p243
        %p418 = pneg %p272
        %p419 = pneg %p269
        %s420 = sand.u32 %s259, 1
        %s421 = scalar_lea.sflag [#allocation4], %s420
        %s422 = sand.u32 %s259, 1
        %s423 = smul.addr %s422, 8
        %s424 = scalar_lea.vmem [#allocation7], %s423
        %p425 = pneg %p298
        %p426 = pneg %p295
        %s427 = sand.u32 %s285, 1
        %s428 = scalar_lea.sflag [#allocation9], %s427
        %s429 = sand.u32 %s285, 1
        %s430 = smul.addr %s429, 32
        %s431 = scalar_lea.vmem [#allocation8], %s430
        %p432 = scmp.lt.s32.totalorder %s31, 1
        %s433 = scalar_select %p432, %s31, 1
        %s434 = smul.addr %s433, 8
        %s435 = scalar_lea.vmem %s0, %s434
        %p436 = scmp.lt.s32.totalorder %s31, 1
        %s437 = scalar_select %p436, %s31, 1
        %s438 = smul.addr %s437, 8
        %s439 = scalar_lea.vmem %s1, %s438
        %v441 = vld [vmem:[%s435] sm:$0xff]
        %v442 = vld [vmem:[%s439] sm:$0xff]
        %v443 = vpack.c.bf16 %v441, %v441
        %v444 = vld [vmem:[%s2] sm:$0xf]
        %v445 = vld [vmem:[%s2 + $0x4] sm:$0xf]
        %v446 = vld [vmem:[%s2 + $0x8] sm:$0xf]
        %v447 = vld [vmem:[%s2 + $0xc] sm:$0xf]
        %v452 = vunpack.c.l.b16 %v444
        %v453 = vunpack.c.l.b16 %v445
        %v454 = vunpack.c.l.b16 %v446
        %v455 = vunpack.c.l.b16 %v447
        %v456 = vpack.c.b16 %v453, %v452
        %v457 = vpack.c.b16 %v455, %v454
        %vm460 = vcmask 261120
        %v462 = vsel %vm460, %v443, 0
        %464 = vmatprep.subr.bf16.mxu0 0
        %465 = vmatpush1.bf16.msra.mxu0 %v456
        %466 = vmatprep.subr.bf16.mxu0 0
        %467 = vmatpush1.bf16.msra.mxu0 %v457
        %468 = vmatprep.subr.bf16.mxu0 0
        %469 = vmatpush1.bf16.msra.mxu0 0
        %470 = vmatprep.subr.bf16.mxu0 0
        %471 = vmatpush1.bf16.msra.mxu0 0
        %472 = vmatprep.subr.bf16.mxu0 0
        %473 = vmatpush1.bf16.msra.mxu0 0
        %474 = vmatprep.subr.bf16.mxu0 0
        %475 = vmatpush1.bf16.msra.mxu0 0
        %476 = vmatprep.subr.bf16.mxu0 0
        %477 = vmatpush1.bf16.msra.mxu0 0
        %478 = vmatprep.subr.bf16.mxu0 0
        %479 = vmatpush1.bf16.msra.mxu0 0
        %480 = vmatprep.subr.bf16.mxu0 0
        %481 = vmatpush1.bf16.msra.mxu0 0
        %482 = vmatprep.subr.bf16.mxu0 0
        %483 = vmatpush1.bf16.msra.mxu0 0
        %484 = vmatprep.subr.bf16.mxu0 0
        %485 = vmatpush1.bf16.msra.mxu0 0
        %486 = vmatprep.subr.bf16.mxu0 0
        %487 = vmatpush1.bf16.msra.mxu0 0
        %488 = vmatprep.subr.bf16.mxu0 0
        %489 = vmatpush1.bf16.msra.mxu0 0
        %490 = vmatprep.subr.bf16.mxu0 0
        %491 = vmatpush1.bf16.msra.mxu0 0
        %492 = vmatprep.subr.bf16.mxu0 0
        %493 = vmatpush1.bf16.msra.mxu0 0
        %494 = vmatprep.subr.bf16.mxu0 0
        %495 = vmatpush1.bf16.msra.mxu0 0
        %496 = vmatprep.mubr.bf16.mxu0 0
        %497 = vmatmul.mubr.bf16.gmra.mrb[0].mxu0 %v462
        %v498 = vpop.f32.mrb[0].mxu0
        %v499 = vadd.f32 0.0, %v498
        %v500 = vpop.f32.mrb[0].mxu0
        %v501 = vpop.f32.mrb[0].mxu0
        %v502 = vpop.f32.mrb[0].mxu0
        %503 = vdwg.mxu0
        %505 = vrot.lane.b32.xlu0 %v499, 120
        %v506 = vpop.permute.xlu0 %505
        %508 = vrot.lane.b32.xlu0 %v499, 112
        %v509 = vpop.permute.xlu0 %508
        %511 = vrot.lane.b32.xlu0 %v499, 104
        %v512 = vpop.permute.xlu0 %511
        %v514 = vpack.c.bf16 %v499, %v499
        %v515 = vpack.c.bf16 %v506, %v506
        %v516 = vpack.c.bf16 %v509, %v509
        %v517 = vpack.c.bf16 %v512, %v512
        %519 = vrot.lane.b32.xlu0 %v514, 96
        %v520 = vpop.permute.xlu0 %519
        %vm521 = vcmask 64512
        %v523 = vsel %vm521, %v514, 0
        %v526 = vsel %vm521, %v520, 0
        %528 = vmatprep.subr.bf16.mxu0 0
        %529 = vmatpush1.bf16.xpose.msra.mxu0 %v526
        %530 = vmatprep.subr.bf16.mxu0 0
        %531 = vmatpush1.bf16.xpose.msra.mxu0 0
        %532 = vmatprep.subr.bf16.mxu0 0
        %533 = vmatpush1.bf16.xpose.msra.mxu0 0
        %534 = vmatprep.subr.bf16.mxu0 0
        %535 = vmatpush1.bf16.xpose.msra.mxu0 0
        %536 = vmatprep.subr.bf16.mxu0 0
        %537 = vmatpush1.bf16.xpose.msra.mxu0 0
        %538 = vmatprep.subr.bf16.mxu0 0
        %539 = vmatpush1.bf16.xpose.msra.mxu0 0
        %540 = vmatprep.subr.bf16.mxu0 0
        %541 = vmatpush1.bf16.xpose.msra.mxu0 0
        %542 = vmatprep.subr.bf16.mxu0 0
        %543 = vmatpush1.bf16.xpose.msra.mxu0 0
        %544 = vmatprep.subr.bf16.mxu0 0
        %545 = vmatpush1.bf16.xpose.msra.mxu0 0
        %546 = vmatprep.subr.bf16.mxu0 0
        %547 = vmatpush1.bf16.xpose.msra.mxu0 0
        %548 = vmatprep.subr.bf16.mxu0 0
        %549 = vmatpush1.bf16.xpose.msra.mxu0 0
        %550 = vmatprep.subr.bf16.mxu0 0
        %551 = vmatpush1.bf16.xpose.msra.mxu0 0
        %552 = vmatprep.subr.bf16.mxu0 0
        %553 = vmatpush1.bf16.xpose.msra.mxu0 0
        %554 = vmatprep.subr.bf16.mxu0 0
        %555 = vmatpush1.bf16.xpose.msra.mxu0 0
        %556 = vmatprep.subr.bf16.mxu0 0
        %557 = vmatpush1.bf16.xpose.msra.mxu0 0
        %558 = vmatprep.subr.bf16.mxu0 0
        %559 = vmatpush1.bf16.xpose.msra.mxu0 0
        %560 = vmatprep.mubr.bf16.mxu0 0
        %561 = vmatmul.mubr.bf16.gmra.mrb[0].mxu0 %v523
        %v562 = vpop.f32.mrb[0].mxu0
        %v563 = vadd.f32 0.0, %v562
        %v564 = vpop.f32.mrb[0].mxu0
        %v565 = vpop.f32.mrb[0].mxu0
        %v566 = vpop.f32.mrb[0].mxu0
        %567 = vdwg.mxu0
        %569 = vrot.lane.b32.xlu0 %v515, 96
        %v570 = vpop.permute.xlu0 %569
        %v572 = vsel %vm521, %v515, 0
        %v575 = vsel %vm521, %v570, 0
        %577 = vmatprep.subr.bf16.mxu0 0
        %578 = vmatpush1.bf16.xpose.msra.mxu0 %v575
        %579 = vmatprep.subr.bf16.mxu0 0
        %580 = vmatpush1.bf16.xpose.msra.mxu0 0
        %581 = vmatprep.subr.bf16.mxu0 0
        %582 = vmatpush1.bf16.xpose.msra.mxu0 0
        %583 = vmatprep.subr.bf16.mxu0 0
        %584 = vmatpush1.bf16.xpose.msra.mxu0 0
        %585 = vmatprep.subr.bf16.mxu0 0
        %586 = vmatpush1.bf16.xpose.msra.mxu0 0
        %587 = vmatprep.subr.bf16.mxu0 0
        %588 = vmatpush1.bf16.xpose.msra.mxu0 0
        %589 = vmatprep.subr.bf16.mxu0 0
        %590 = vmatpush1.bf16.xpose.msra.mxu0 0
        %591 = vmatprep.subr.bf16.mxu0 0
        %592 = vmatpush1.bf16.xpose.msra.mxu0 0
        %593 = vmatprep.subr.bf16.mxu0 0
        %594 = vmatpush1.bf16.xpose.msra.mxu0 0
        %595 = vmatprep.subr.bf16.mxu0 0
        %596 = vmatpush1.bf16.xpose.msra.mxu0 0
        %597 = vmatprep.subr.bf16.mxu0 0
        %598 = vmatpush1.bf16.xpose.msra.mxu0 0
        %599 = vmatprep.subr.bf16.mxu0 0
        %600 = vmatpush1.bf16.xpose.msra.mxu0 0
        %601 = vmatprep.subr.bf16.mxu0 0
        %602 = vmatpush1.bf16.xpose.msra.mxu0 0
        %603 = vmatprep.subr.bf16.mxu0 0
        %604 = vmatpush1.bf16.xpose.msra.mxu0 0
        %605 = vmatprep.subr.bf16.mxu0 0
        %606 = vmatpush1.bf16.xpose.msra.mxu0 0
        %607 = vmatprep.subr.bf16.mxu0 0
        %608 = vmatpush1.bf16.xpose.msra.mxu0 0
        %609 = vmatprep.mubr.bf16.mxu0 0
        %610 = vmatmul.mubr.bf16.gmra.mrb[0].mxu0 %v572
        %v611 = vpop.f32.mrb[0].mxu0
        %v612 = vadd.f32 0.0, %v611
        %v613 = vpop.f32.mrb[0].mxu0
        %v614 = vpop.f32.mrb[0].mxu0
        %v615 = vpop.f32.mrb[0].mxu0
        %616 = vdwg.mxu0
        %618 = vrot.lane.b32.xlu0 %v516, 96
        %v619 = vpop.permute.xlu0 %618
        %v621 = vsel %vm521, %v516, 0
        %v624 = vsel %vm521, %v619, 0
        %626 = vmatprep.subr.bf16.mxu0 0
        %627 = vmatpush1.bf16.xpose.msra.mxu0 %v624
        %628 = vmatprep.subr.bf16.mxu0 0
        %629 = vmatpush1.bf16.xpose.msra.mxu0 0
        %630 = vmatprep.subr.bf16.mxu0 0
        %631 = vmatpush1.bf16.xpose.msra.mxu0 0
        %632 = vmatprep.subr.bf16.mxu0 0
        %633 = vmatpush1.bf16.xpose.msra.mxu0 0
        %634 = vmatprep.subr.bf16.mxu0 0
        %635 = vmatpush1.bf16.xpose.msra.mxu0 0
        %636 = vmatprep.subr.bf16.mxu0 0
        %637 = vmatpush1.bf16.xpose.msra.mxu0 0
        %638 = vmatprep.subr.bf16.mxu0 0
        %639 = vmatpush1.bf16.xpose.msra.mxu0 0
        %640 = vmatprep.subr.bf16.mxu0 0
        %641 = vmatpush1.bf16.xpose.msra.mxu0 0
        %642 = vmatprep.subr.bf16.mxu0 0
        %643 = vmatpush1.bf16.xpose.msra.mxu0 0
        %644 = vmatprep.subr.bf16.mxu0 0
        %645 = vmatpush1.bf16.xpose.msra.mxu0 0
        %646 = vmatprep.subr.bf16.mxu0 0
        %647 = vmatpush1.bf16.xpose.msra.mxu0 0
        %648 = vmatprep.subr.bf16.mxu0 0
        %649 = vmatpush1.bf16.xpose.msra.mxu0 0
        %650 = vmatprep.subr.bf16.mxu0 0
        %651 = vmatpush1.bf16.xpose.msra.mxu0 0
        %652 = vmatprep.subr.bf16.mxu0 0
        %653 = vmatpush1.bf16.xpose.msra.mxu0 0
        %654 = vmatprep.subr.bf16.mxu0 0
        %655 = vmatpush1.bf16.xpose.msra.mxu0 0
        %656 = vmatprep.subr.bf16.mxu0 0
        %657 = vmatpush1.bf16.xpose.msra.mxu0 0
        %658 = vmatprep.mubr.bf16.mxu0 0
        %659 = vmatmul.mubr.bf16.gmra.mrb[0].mxu0 %v621
        %v660 = vpop.f32.mrb[0].mxu0
        %v661 = vadd.f32 0.0, %v660
        %v662 = vpop.f32.mrb[0].mxu0
        %v663 = vpop.f32.mrb[0].mxu0
        %v664 = vpop.f32.mrb[0].mxu0
        %665 = vdwg.mxu0
        %667 = vrot.lane.b32.xlu0 %v517, 96
        %v668 = vpop.permute.xlu0 %667
        %v670 = vsel %vm521, %v517, 0
        %v673 = vsel %vm521, %v668, 0
        %675 = vmatprep.subr.bf16.mxu0 0
        %676 = vmatpush1.bf16.xpose.msra.mxu0 %v673
        %677 = vmatprep.subr.bf16.mxu0 0
        %678 = vmatpush1.bf16.xpose.msra.mxu0 0
        %679 = vmatprep.subr.bf16.mxu0 0
        %680 = vmatpush1.bf16.xpose.msra.mxu0 0
        %681 = vmatprep.subr.bf16.mxu0 0
        %682 = vmatpush1.bf16.xpose.msra.mxu0 0
        %683 = vmatprep.subr.bf16.mxu0 0
        %684 = vmatpush1.bf16.xpose.msra.mxu0 0
        %685 = vmatprep.subr.bf16.mxu0 0
        %686 = vmatpush1.bf16.xpose.msra.mxu0 0
        %687 = vmatprep.subr.bf16.mxu0 0
        %688 = vmatpush1.bf16.xpose.msra.mxu0 0
        %689 = vmatprep.subr.bf16.mxu0 0
        %690 = vmatpush1.bf16.xpose.msra.mxu0 0
        %691 = vmatprep.subr.bf16.mxu0 0
        %692 = vmatpush1.bf16.xpose.msra.mxu0 0
        %693 = vmatprep.subr.bf16.mxu0 0
        %694 = vmatpush1.bf16.xpose.msra.mxu0 0
        %695 = vmatprep.subr.bf16.mxu0 0
        %696 = vmatpush1.bf16.xpose.msra.mxu0 0
        %697 = vmatprep.subr.bf16.mxu0 0
        %698 = vmatpush1.bf16.xpose.msra.mxu0 0
        %699 = vmatprep.subr.bf16.mxu0 0
        %700 = vmatpush1.bf16.xpose.msra.mxu0 0
        %701 = vmatprep.subr.bf16.mxu0 0
        %702 = vmatpush1.bf16.xpose.msra.mxu0 0
        %703 = vmatprep.subr.bf16.mxu0 0
        %704 = vmatpush1.bf16.xpose.msra.mxu0 0
        %705 = vmatprep.subr.bf16.mxu0 0
        %706 = vmatpush1.bf16.xpose.msra.mxu0 0
        %707 = vmatprep.mubr.bf16.mxu0 0
        %708 = vmatmul.mubr.bf16.gmra.mrb[0].mxu0 %v670
        %v709 = vpop.f32.mrb[0].mxu0
        %v710 = vadd.f32 0.0, %v709
        %v711 = vpop.f32.mrb[0].mxu0
        %v712 = vpop.f32.mrb[0].mxu0
        %v713 = vpop.f32.mrb[0].mxu0
        %714 = vdwg.mxu0
        %v715 = vmul.f32 %v563, 0.35355338
        %v716 = vmul.f32 %v612, 0.35355338
        %v717 = vmul.f32 %v661, 0.35355338
        %v718 = vmul.f32 %v710, 0.35355338
        %v719 = vadd.f32 %v715, %v442
        %v720 = vadd.f32 %v716, %v442
        %v721 = vadd.f32 %v717, %v442
        %v722 = vadd.f32 %v718, %v442
        %v723 = vsel %vm521, %v719, -inf
        %724 = vmax.xlane.f32.xlu0 %v723
        %v725 = vpop.xlane.xlu0 %724
        %v726 = vsel %vm521, %v720, -inf
        %727 = vmax.xlane.f32.xlu0 %v726
        %v728 = vpop.xlane.xlu0 %727
        %v729 = vsel %vm521, %v721, -inf
        %730 = vmax.xlane.f32.xlu0 %v729
        %v731 = vpop.xlane.xlu0 %730
        %v732 = vsel %vm521, %v722, -inf
        %733 = vmax.xlane.f32.xlu0 %v732
        %v734 = vpop.xlane.xlu0 %733
        %v735 = vsub.f32 %v719, %v725
        %v736 = vsub.f32 %v720, %v728
        %v737 = vsub.f32 %v721, %v731
        %v738 = vsub.f32 %v722, %v734
        %v739 = vmul.f32 %v735, 1.442695
        %v740 = vpow.pop %v739
        %v741 = vmul.f32 %v736, 1.442695
        %v742 = vpow.pop %v741
        %v743 = vmul.f32 %v737, 1.442695
        %v744 = vpow.pop %v743
        %v745 = vmul.f32 %v738, 1.442695
        %v746 = vpow.pop %v745
        %v747 = vsel %vm521, %v740, 0.0
        %748 = vadd.xlane.f32.xlu0 %v747
        %v749 = vpop.xlane.xlu0 %748
        %v750 = vsel %vm521, %v742, 0.0
        %751 = vadd.xlane.f32.xlu0 %v750
        %v752 = vpop.xlane.xlu0 %751
        %v753 = vsel %vm521, %v744, 0.0
        %754 = vadd.xlane.f32.xlu0 %v753
        %v755 = vpop.xlane.xlu0 %754
        %v756 = vsel %vm521, %v746, 0.0
        %757 = vadd.xlane.f32.xlu0 %v756
        %v758 = vpop.xlane.xlu0 %757
        %v759 = vrcp.pop %v749
        %v760 = vrcp.pop %v752
        %v761 = vrcp.pop %v755
        %v762 = vrcp.pop %v758
        %v763 = vmul.f32 %v740, %v759
        %v764 = vmul.f32 %v742, %v760
        %v765 = vmul.f32 %v744, %v761
        %v766 = vmul.f32 %v746, %v762
        %767 = vst.msk [vmem:[%s431] sm:$0xff] %vm521, %v763
        %768 = vst.msk [vmem:[%s431 + $0x8] sm:$0xff] %vm521, %v764
        %769 = vst.msk [vmem:[%s431 + $0x10] sm:$0xff] %vm521, %v765
        %770 = vst.msk [vmem:[%s431 + $0x18] sm:$0xff] %vm521, %v766
        %v771 = vpack.c.bf16 %v763, %v763
        %v772 = vpack.c.bf16 %v764, %v764
        %v773 = vpack.c.bf16 %v765, %v765
        %v774 = vpack.c.bf16 %v766, %v766
        %775 = vrot.lane.b32.xlu0 %v514, 64
        %v776 = vpop.permute.xlu0 %775
        %v778 = vsel %vm521, %v771, 0
        %vm780 = vcmask 1043456
        %v782 = vsel %vm780, %v776, 0
        %784 = vmatprep.subr.bf16.mxu0 0
        %785 = vmatpush1.bf16.msra.mxu0 %v782
        %786 = vmatprep.subr.bf16.mxu0 0
        %787 = vmatpush1.bf16.msra.mxu0 0
        %788 = vmatprep.subr.bf16.mxu0 0
        %789 = vmatpush1.bf16.msra.mxu0 0
        %790 = vmatprep.subr.bf16.mxu0 0
        %791 = vmatpush1.bf16.msra.mxu0 0
        %792 = vmatprep.subr.bf16.mxu0 0
        %793 = vmatpush1.bf16.msra.mxu0 0
        %794 = vmatprep.subr.bf16.mxu0 0
        %795 = vmatpush1.bf16.msra.mxu0 0
        %796 = vmatprep.subr.bf16.mxu0 0
        %797 = vmatpush1.bf16.msra.mxu0 0
        %798 = vmatprep.subr.bf16.mxu0 0
        %799 = vmatpush1.bf16.msra.mxu0 0
        %800 = vmatprep.subr.bf16.mxu0 0
        %801 = vmatpush1.bf16.msra.mxu0 0
        %802 = vmatprep.subr.bf16.mxu0 0
        %803 = vmatpush1.bf16.msra.mxu0 0
        %804 = vmatprep.subr.bf16.mxu0 0
        %805 = vmatpush1.bf16.msra.mxu0 0
        %806 = vmatprep.subr.bf16.mxu0 0
        %807 = vmatpush1.bf16.msra.mxu0 0
        %808 = vmatprep.subr.bf16.mxu0 0
        %809 = vmatpush1.bf16.msra.mxu0 0
        %810 = vmatprep.subr.bf16.mxu0 0
        %811 = vmatpush1.bf16.msra.mxu0 0
        %812 = vmatprep.subr.bf16.mxu0 0
        %813 = vmatpush1.bf16.msra.mxu0 0
        %814 = vmatprep.subr.bf16.mxu0 0
        %815 = vmatpush1.bf16.msra.mxu0 0
        %816 = vmatprep.mubr.bf16.mxu0 0
        %817 = vmatmul.mubr.bf16.gmra.mrb[0].mxu0 %v778
        %v818 = vpop.f32.mrb[0].mxu0
        %v819 = vadd.f32 0.0, %v818
        %v820 = vpop.f32.mrb[0].mxu0
        %v821 = vpop.f32.mrb[0].mxu0
        %v822 = vpop.f32.mrb[0].mxu0
        %823 = vdwg.mxu0
        %824 = vrot.lane.b32.xlu0 %v515, 64
        %v825 = vpop.permute.xlu0 %824
        %v827 = vsel %vm521, %v772, 0
        %v830 = vsel %vm780, %v825, 0
        %832 = vmatprep.subr.bf16.mxu0 0
        %833 = vmatpush1.bf16.msra.mxu0 %v830
        %834 = vmatprep.subr.bf16.mxu0 0
        %835 = vmatpush1.bf16.msra.mxu0 0
        %836 = vmatprep.subr.bf16.mxu0 0
        %837 = vmatpush1.bf16.msra.mxu0 0
        %838 = vmatprep.subr.bf16.mxu0 0
        %839 = vmatpush1.bf16.msra.mxu0 0
        %840 = vmatprep.subr.bf16.mxu0 0
        %841 = vmatpush1.bf16.msra.mxu0 0
        %842 = vmatprep.subr.bf16.mxu0 0
        %843 = vmatpush1.bf16.msra.mxu0 0
        %844 = vmatprep.subr.bf16.mxu0 0
        %845 = vmatpush1.bf16.msra.mxu0 0
        %846 = vmatprep.subr.bf16.mxu0 0
        %847 = vmatpush1.bf16.msra.mxu0 0
        %848 = vmatprep.subr.bf16.mxu0 0
        %849 = vmatpush1.bf16.msra.mxu0 0
        %850 = vmatprep.subr.bf16.mxu0 0
        %851 = vmatpush1.bf16.msra.mxu0 0
        %852 = vmatprep.subr.bf16.mxu0 0
        %853 = vmatpush1.bf16.msra.mxu0 0
        %854 = vmatprep.subr.bf16.mxu0 0
        %855 = vmatpush1.bf16.msra.mxu0 0
        %856 = vmatprep.subr.bf16.mxu0 0
        %857 = vmatpush1.bf16.msra.mxu0 0
        %858 = vmatprep.subr.bf16.mxu0 0
        %859 = vmatpush1.bf16.msra.mxu0 0
        %860 = vmatprep.subr.bf16.mxu0 0
        %861 = vmatpush1.bf16.msra.mxu0 0
        %862 = vmatprep.subr.bf16.mxu0 0
        %863 = vmatpush1.bf16.msra.mxu0 0
        %864 = vmatprep.mubr.bf16.mxu0 0
        %865 = vmatmul.mubr.bf16.gmra.mrb[0].mxu0 %v827
        %v866 = vpop.f32.mrb[0].mxu0
        %v867 = vadd.f32 0.0, %v866
        %v868 = vpop.f32.mrb[0].mxu0
        %v869 = vpop.f32.mrb[0].mxu0
        %v870 = vpop.f32.mrb[0].mxu0
        %871 = vdwg.mxu0
        %872 = vrot.lane.b32.xlu0 %v516, 64
        %v873 = vpop.permute.xlu0 %872
        %v875 = vsel %vm521, %v773, 0
        %v878 = vsel %vm780, %v873, 0
        %880 = vmatprep.subr.bf16.mxu0 0
        %881 = vmatpush1.bf16.msra.mxu0 %v878
        %882 = vmatprep.subr.bf16.mxu0 0
        %883 = vmatpush1.bf16.msra.mxu0 0
        %884 = vmatprep.subr.bf16.mxu0 0
        %885 = vmatpush1.bf16.msra.mxu0 0
        %886 = vmatprep.subr.bf16.mxu0 0
        %887 = vmatpush1.bf16.msra.mxu0 0
        %888 = vmatprep.subr.bf16.mxu0 0
        %889 = vmatpush1.bf16.msra.mxu0 0
        %890 = vmatprep.subr.bf16.mxu0 0
        %891 = vmatpush1.bf16.msra.mxu0 0
        %892 = vmatprep.subr.bf16.mxu0 0
        %893 = vmatpush1.bf16.msra.mxu0 0
        %894 = vmatprep.subr.bf16.mxu0 0
        %895 = vmatpush1.bf16.msra.mxu0 0
        %896 = vmatprep.subr.bf16.mxu0 0
        %897 = vmatpush1.bf16.msra.mxu0 0
        %898 = vmatprep.subr.bf16.mxu0 0
        %899 = vmatpush1.bf16.msra.mxu0 0
        %900 = vmatprep.subr.bf16.mxu0 0
        %901 = vmatpush1.bf16.msra.mxu0 0
        %902 = vmatprep.subr.bf16.mxu0 0
        %903 = vmatpush1.bf16.msra.mxu0 0
        %904 = vmatprep.subr.bf16.mxu0 0
        %905 = vmatpush1.bf16.msra.mxu0 0
        %906 = vmatprep.subr.bf16.mxu0 0
        %907 = vmatpush1.bf16.msra.mxu0 0
        %908 = vmatprep.subr.bf16.mxu0 0
        %909 = vmatpush1.bf16.msra.mxu0 0
        %910 = vmatprep.subr.bf16.mxu0 0
        %911 = vmatpush1.bf16.msra.mxu0 0
        %912 = vmatprep.mubr.bf16.mxu0 0
        %913 = vmatmul.mubr.bf16.gmra.mrb[0].mxu0 %v875
        %v914 = vpop.f32.mrb[0].mxu0
        %v915 = vadd.f32 0.0, %v914
        %v916 = vpop.f32.mrb[0].mxu0
        %v917 = vpop.f32.mrb[0].mxu0
        %v918 = vpop.f32.mrb[0].mxu0
        %919 = vdwg.mxu0
        %920 = vrot.lane.b32.xlu0 %v517, 64
        %v921 = vpop.permute.xlu0 %920
        %v923 = vsel %vm521, %v774, 0
        %v926 = vsel %vm780, %v921, 0
        %928 = vmatprep.subr.bf16.mxu0 0
        %929 = vmatpush1.bf16.msra.mxu0 %v926
        %930 = vmatprep.subr.bf16.mxu0 0
        %931 = vmatpush1.bf16.msra.mxu0 0
        %932 = vmatprep.subr.bf16.mxu0 0
        %933 = vmatpush1.bf16.msra.mxu0 0
        %934 = vmatprep.subr.bf16.mxu0 0
        %935 = vmatpush1.bf16.msra.mxu0 0
        %936 = vmatprep.subr.bf16.mxu0 0
        %937 = vmatpush1.bf16.msra.mxu0 0
        %938 = vmatprep.subr.bf16.mxu0 0
        %939 = vmatpush1.bf16.msra.mxu0 0
        %940 = vmatprep.subr.bf16.mxu0 0
        %941 = vmatpush1.bf16.msra.mxu0 0
        %942 = vmatprep.subr.bf16.mxu0 0
        %943 = vmatpush1.bf16.msra.mxu0 0
        %944 = vmatprep.subr.bf16.mxu0 0
        %945 = vmatpush1.bf16.msra.mxu0 0
        %946 = vmatprep.subr.bf16.mxu0 0
        %947 = vmatpush1.bf16.msra.mxu0 0
        %948 = vmatprep.subr.bf16.mxu0 0
        %949 = vmatpush1.bf16.msra.mxu0 0
        %950 = vmatprep.subr.bf16.mxu0 0
        %951 = vmatpush1.bf16.msra.mxu0 0
        %952 = vmatprep.subr.bf16.mxu0 0
        %953 = vmatpush1.bf16.msra.mxu0 0
        %954 = vmatprep.subr.bf16.mxu0 0
        %955 = vmatpush1.bf16.msra.mxu0 0
        %956 = vmatprep.subr.bf16.mxu0 0
        %957 = vmatpush1.bf16.msra.mxu0 0
        %958 = vmatprep.subr.bf16.mxu0 0
        %959 = vmatpush1.bf16.msra.mxu0 0
        %960 = vmatprep.mubr.bf16.mxu0 0
        %961 = vmatmul.mubr.bf16.gmra.mrb[0].mxu0 %v923
        %v962 = vpop.f32.mrb[0].mxu0
        %v963 = vadd.f32 0.0, %v962
        %v964 = vpop.f32.mrb[0].mxu0
        %v965 = vpop.f32.mrb[0].mxu0
        %v966 = vpop.f32.mrb[0].mxu0
        %967 = vdwg.mxu0
        %969 = vrot.lane.b32.xlu0 %v867, 8
        %v970 = vpop.permute.xlu0 %969
        %973 = vrot.lane.b32.xlu0 %v915, 16
        %v974 = vpop.permute.xlu0 %973
        %977 = vrot.lane.b32.xlu0 %v963, 24
        %v978 = vpop.permute.xlu0 %977
        %v980 = vsel %vm521, %v819, %v970
        %vm981 = vcmask 130048
        %v982 = vsel %vm981, %v980, %v974
        %vm983 = vcmask 195584
        %v984 = vsel %vm983, %v982, %v978
        %v985 = vpack.c.bf16 %v984, %v984
        %v986 = vld [vmem:[#allocation2] sm:$0xf]
        %v987 = vld [vmem:[#allocation2 + $0x4] sm:$0xf]
        %v988 = vld [vmem:[#allocation2 + $0x8] sm:$0xf]
        %v989 = vld [vmem:[#allocation2 + $0xc] sm:$0xf]
        %v994 = vunpack.c.l.b16 %v986
        %v995 = vunpack.c.l.b16 %v987
        %v996 = vunpack.c.l.b16 %v988
        %v997 = vunpack.c.l.b16 %v989
        %v998 = vpack.c.b16 %v995, %v994
        %v999 = vpack.c.b16 %v997, %v996
        %v1003 = vsel %vm460, %v985, 0
        %1005 = vmatprep.subr.bf16.mxu0 0
        %1006 = vmatpush1.bf16.msra.mxu0 %v998
        %1007 = vmatprep.subr.bf16.mxu0 0
        %1008 = vmatpush1.bf16.msra.mxu0 %v999
        %1009 = vmatprep.subr.bf16.mxu0 0
        %1010 = vmatpush1.bf16.msra.mxu0 0
        %1011 = vmatprep.subr.bf16.mxu0 0
        %1012 = vmatpush1.bf16.msra.mxu0 0
        %1013 = vmatprep.subr.bf16.mxu0 0
        %1014 = vmatpush1.bf16.msra.mxu0 0
        %1015 = vmatprep.subr.bf16.mxu0 0
        %1016 = vmatpush1.bf16.msra.mxu0 0
        %1017 = vmatprep.subr.bf16.mxu0 0
        %1018 = vmatpush1.bf16.msra.mxu0 0
        %1019 = vmatprep.subr.bf16.mxu0 0
        %1020 = vmatpush1.bf16.msra.mxu0 0
        %1021 = vmatprep.subr.bf16.mxu0 0
        %1022 = vmatpush1.bf16.msra.mxu0 0
        %1023 = vmatprep.subr.bf16.mxu0 0
        %1024 = vmatpush1.bf16.msra.mxu0 0
        %1025 = vmatprep.subr.bf16.mxu0 0
        %1026 = vmatpush1.bf16.msra.mxu0 0
        %1027 = vmatprep.subr.bf16.mxu0 0
        %1028 = vmatpush1.bf16.msra.mxu0 0
        %1029 = vmatprep.subr.bf16.mxu0 0
        %1030 = vmatpush1.bf16.msra.mxu0 0
        %1031 = vmatprep.subr.bf16.mxu0 0
        %1032 = vmatpush1.bf16.msra.mxu0 0
        %1033 = vmatprep.subr.bf16.mxu0 0
        %1034 = vmatpush1.bf16.msra.mxu0 0
        %1035 = vmatprep.subr.bf16.mxu0 0
        %1036 = vmatpush1.bf16.msra.mxu0 0
        %1037 = vmatprep.mubr.bf16.mxu0 0
        %1038 = vmatmul.mubr.bf16.gmra.mrb[0].mxu0 %v1003
        %v1039 = vpop.f32.mrb[0].mxu0
        %v1040 = vadd.f32 %v441, %v1039
        %v1041 = vpop.f32.mrb[0].mxu0
        %v1042 = vpop.f32.mrb[0].mxu0
        %v1043 = vpop.f32.mrb[0].mxu0
        %1044 = vdwg.mxu0
        %v1045 = vld [vmem:[%s4] sm:$0x1]
        %v1046 = vld [vmem:[%s5] sm:$0x1]
        %v1047 = vsel %vm460, %v1040, 0.0
        %1048 = vadd.xlane.f32.xlu0 %v1047
        %v1049 = vpop.xlane.xlu0 %1048
        %v1050 = vrcp.pop 32.0
        %v1051 = vmul.f32 %v1049, %v1050
        %v1052 = vsub.f32 %v1040, %v1051
        %v1053 = vmul.f32 %v1052, %v1052
        %v1054 = vsel %vm460, %v1053, 0.0
        %1055 = vadd.xlane.f32.xlu0 %v1054
        %v1056 = vpop.xlane.xlu0 %1055
        %v1057 = vmul.f32 %v1056, %v1050
        %v1058 = vadd.f32 %v1057, 1e-05
        %v1059 = vrsqrt.pop %v1058
        %v1060 = vmul.f32 %v1052, %v1059
        %v1062 = vlaneseq
        %v1063 = vshrl.u32 %v1062, 7
        %v1064 = vsub.s32 0, %v1063
        %v1065 = vrot.slane %v1045, %v1064
        %v1067 = vmul.f32 %v1060, %v1065
        %v1069 = vlaneseq
        %v1070 = vshrl.u32 %v1069, 7
        %v1071 = vsub.s32 0, %v1070
        %v1072 = vrot.slane %v1046, %v1071
        %v1074 = vadd.f32 %v1067, %v1072
        %v1075 = vpack.c.bf16 %v1074, %v1074
        %v1076 = vld [vmem:[#allocation5] sm:$0xf]
        %v1077 = vld [vmem:[#allocation5 + $0x4] sm:$0xf]
        %v1078 = vld [vmem:[#allocation5 + $0x8] sm:$0xf]
        %v1079 = vld [vmem:[#allocation5 + $0xc] sm:$0xf]
        %v1084 = vunpack.c.l.b16 %v1076
        %v1085 = vunpack.c.l.b16 %v1077
        %v1086 = vunpack.c.l.b16 %v1078
        %v1087 = vunpack.c.l.b16 %v1079
        %v1088 = vpack.c.b16 %v1085, %v1084
        %v1089 = vpack.c.b16 %v1087, %v1086
        %v1093 = vsel %vm460, %v1075, 0
        %1095 = vmatprep.subr.bf16.mxu0 0
        %1096 = vmatpush1.bf16.msra.mxu0 %v1088
        %1097 = vmatprep.subr.bf16.mxu0 0
        %1098 = vmatpush1.bf16.msra.mxu0 %v1089
        %1099 = vmatprep.subr.bf16.mxu0 0
        %1100 = vmatpush1.bf16.msra.mxu0 0
        %1101 = vmatprep.subr.bf16.mxu0 0
        %1102 = vmatpush1.bf16.msra.mxu0 0
        %1103 = vmatprep.subr.bf16.mxu0 0
        %1104 = vmatpush1.bf16.msra.mxu0 0
        %1105 = vmatprep.subr.bf16.mxu0 0
        %1106 = vmatpush1.bf16.msra.mxu0 0
        %1107 = vmatprep.subr.bf16.mxu0 0
        %1108 = vmatpush1.bf16.msra.mxu0 0
        %1109 = vmatprep.subr.bf16.mxu0 0
        %1110 = vmatpush1.bf16.msra.mxu0 0
        %1111 = vmatprep.subr.bf16.mxu0 0
        %1112 = vmatpush1.bf16.msra.mxu0 0
        %1113 = vmatprep.subr.bf16.mxu0 0
        %1114 = vmatpush1.bf16.msra.mxu0 0
        %1115 = vmatprep.subr.bf16.mxu0 0
        %1116 = vmatpush1.bf16.msra.mxu0 0
        %1117 = vmatprep.subr.bf16.mxu0 0
        %1118 = vmatpush1.bf16.msra.mxu0 0
        %1119 = vmatprep.subr.bf16.mxu0 0
        %1120 = vmatpush1.bf16.msra.mxu0 0
        %1121 = vmatprep.subr.bf16.mxu0 0
        %1122 = vmatpush1.bf16.msra.mxu0 0
        %1123 = vmatprep.subr.bf16.mxu0 0
        %1124 = vmatpush1.bf16.msra.mxu0 0
        %1125 = vmatprep.subr.bf16.mxu0 0
        %1126 = vmatpush1.bf16.msra.mxu0 0
        %1127 = vmatprep.mubr.bf16.mxu0 0
        %1128 = vmatmul.mubr.bf16.gmra.mrb[0].mxu0 %v1093
        %v1129 = vpop.f32.mrb[0].mxu0
        %v1130 = vadd.f32 0.0, %v1129
        %v1131 = vpop.f32.mrb[0].mxu0
        %v1132 = vpop.f32.mrb[0].mxu0
        %v1133 = vpop.f32.mrb[0].mxu0
        %1134 = vdwg.mxu0
        %v1135 = vmax.f32 %v1130, 0.0
        %v1136 = vpack.c.bf16 %v1135, %v1135
        %v1137 = vld [vmem:[%s7] sm:$0xf]
        %v1138 = vld [vmem:[%s7 + $0x4] sm:$0xf]
        %v1139 = vld [vmem:[%s7 + $0x8] sm:$0xf]
        %v1140 = vld [vmem:[%s7 + $0xc] sm:$0xf]
        %v1141 = vld [vmem:[%s7 + $0x10] sm:$0xf]
        %v1142 = vld [vmem:[%s7 + $0x14] sm:$0xf]
        %v1143 = vld [vmem:[%s7 + $0x18] sm:$0xf]
        %v1144 = vld [vmem:[%s7 + $0x1c] sm:$0xf]
        %v1153 = vunpack.c.l.b16 %v1137
        %v1154 = vunpack.c.l.b16 %v1138
        %v1155 = vunpack.c.l.b16 %v1139
        %v1156 = vunpack.c.l.b16 %v1140
        %v1157 = vunpack.c.l.b16 %v1141
        %v1158 = vunpack.c.l.b16 %v1142
        %v1159 = vunpack.c.l.b16 %v1143
        %v1160 = vunpack.c.l.b16 %v1144
        %v1161 = vpack.c.b16 %v1154, %v1153
        %v1162 = vpack.c.b16 %v1156, %v1155
        %v1163 = vpack.c.b16 %v1158, %v1157
        %v1164 = vpack.c.b16 %v1160, %v1159
        %vm1169 = vcmask 523264
        %v1171 = vsel %vm1169, %v1136, 0
        %1173 = vmatprep.subr.bf16.mxu0 0
        %1174 = vmatpush1.bf16.msra.mxu0 %v1161
        %1175 = vmatprep.subr.bf16.mxu0 0
        %1176 = vmatpush1.bf16.msra.mxu0 %v1162
        %1177 = vmatprep.subr.bf16.mxu0 0
        %1178 = vmatpush1.bf16.msra.mxu0 %v1163
        %1179 = vmatprep.subr.bf16.mxu0 0
        %1180 = vmatpush1.bf16.msra.mxu0 %v1164
        %1181 = vmatprep.subr.bf16.mxu0 0
        %1182 = vmatpush1.bf16.msra.mxu0 0
        %1183 = vmatprep.subr.bf16.mxu0 0
        %1184 = vmatpush1.bf16.msra.mxu0 0
        %1185 = vmatprep.subr.bf16.mxu0 0
        %1186 = vmatpush1.bf16.msra.mxu0 0
        %1187 = vmatprep.subr.bf16.mxu0 0
        %1188 = vmatpush1.bf16.msra.mxu0 0
        %1189 = vmatprep.subr.bf16.mxu0 0
        %1190 = vmatpush1.bf16.msra.mxu0 0
        %1191 = vmatprep.subr.bf16.mxu0 0
        %1192 = vmatpush1.bf16.msra.mxu0 0
        %1193 = vmatprep.subr.bf16.mxu0 0
        %1194 = vmatpush1.bf16.msra.mxu0 0
        %1195 = vmatprep.subr.bf16.mxu0 0
        %1196 = vmatpush1.bf16.msra.mxu0 0
        %1197 = vmatprep.subr.bf16.mxu0 0
        %1198 = vmatpush1.bf16.msra.mxu0 0
        %1199 = vmatprep.subr.bf16.mxu0 0
        %1200 = vmatpush1.bf16.msra.mxu0 0
        %1201 = vmatprep.subr.bf16.mxu0 0
        %1202 = vmatpush1.bf16.msra.mxu0 0
        %1203 = vmatprep.subr.bf16.mxu0 0
        %1204 = vmatpush1.bf16.msra.mxu0 0
        %1205 = vmatprep.mubr.bf16.mxu0 0
        %1206 = vmatmul.mubr.bf16.gmra.mrb[0].mxu0 %v1171
        %v1207 = vpop.f32.mrb[0].mxu0
        %v1208 = vadd.f32 %v1074, %v1207
        %v1209 = vpop.f32.mrb[0].mxu0
        %v1210 = vpop.f32.mrb[0].mxu0
        %v1211 = vpop.f32.mrb[0].mxu0
        %1212 = vdwg.mxu0
        %v1213 = vld [vmem:[%s8] sm:$0x1]
        %v1214 = vld [vmem:[%s9] sm:$0x1]
        %v1215 = vsel %vm460, %v1208, 0.0
        %1216 = vadd.xlane.f32.xlu0 %v1215
        %v1217 = vpop.xlane.xlu0 %1216
        %v1218 = vmul.f32 %v1217, %v1050
        %v1219 = vsub.f32 %v1208, %v1218
        %v1220 = vmul.f32 %v1219, %v1219
        %v1221 = vsel %vm460, %v1220, 0.0
        %1222 = vadd.xlane.f32.xlu0 %v1221
        %v1223 = vpop.xlane.xlu0 %1222
        %v1224 = vmul.f32 %v1223, %v1050
        %v1225 = vadd.f32 %v1224, 1e-05
        %v1226 = vrsqrt.pop %v1225
        %v1227 = vmul.f32 %v1219, %v1226
        %v1229 = vlaneseq
        %v1230 = vshrl.u32 %v1229, 7
        %v1231 = vsub.s32 0, %v1230
        %v1232 = vrot.slane %v1213, %v1231
        %v1234 = vmul.f32 %v1227, %v1232
        %v1236 = vlaneseq
        %v1237 = vshrl.u32 %v1236, 7
        %v1238 = vsub.s32 0, %v1237
        %v1239 = vrot.slane %v1214, %v1238
        %v1241 = vadd.f32 %v1234, %v1239
        %1242 = vst.msk [vmem:[%s424] sm:$0xff] %vm460, %v1241
        %s1243 = sand.u32 %s259, 1
        %s1244 = scalar_lea.sflag [#allocation4], %s1243
        %s1245 = sand.u32 %s259, 1
        %s1246 = smul.addr %s1245, 8
        %s1247 = scalar_lea.vmem [#allocation7], %s1246
        %s1248 = sand.u32 %s285, 1
        %s1249 = scalar_lea.sflag [#allocation9], %s1248
        %s1250 = sand.u32 %s285, 1
        %s1251 = smul.addr %s1250, 32
        %s1252 = scalar_lea.vmem [#allocation8], %s1251
        // Predicated region
        $region69: #{tpu_custom_call.1} parent=59 // pred_check
          %p1253 = pneg %p269
        $region70: #{tpu_custom_call.1} parent=59 // pred_check_branch
          %1255 = sbr.rel (%p1253) target = $region72
        $region71: #{tpu_custom_call.1} parent=59 // pred_region
          %s1257 = ssub.s32 128, 128
          %1258 = vsyncadd %s1244, %s1257
          %s1259 = smul.addr %s31, 128
          %s1260 = scalar_lea.hbm %s10, %s1259
          %s1262 = sshll.u32 %s1247, 4
          %s1263 = int_to_ptr.vmem [resolvable:$true] %s1262
          %1265 = dma.vmem_to_hbm [thread:$0]  %s1263, 128, %s1260, %s1244
        $region72: #{tpu_custom_call.1} parent=59 // pred_fallthru
          _
        // Predicated region
        $region73: #{tpu_custom_call.1} parent=59 // pred_check
          %p1266 = pneg %p295
        $region74: #{tpu_custom_call.1} parent=59 // pred_check_branch
          %1268 = sbr.rel (%p1266) target = $region76
        $region75: #{tpu_custom_call.1} parent=59 // pred_region
          %s1270 = ssub.s32 512, 512
          %1271 = vsyncadd %s1249, %s1270
          %s1272 = smul.addr %s31, 4
          %s1273 = smul.addr %s1272, 128
          %s1274 = scalar_lea.hbm %s11, %s1273
          %s1275 = sshll.u32 %s1252, 4
          %s1276 = int_to_ptr.vmem [resolvable:$true] %s1275
          %1281 = dma.vmem_to_hbm [thread:$0]  %s1276, 512, %s1274, %s1249, 128, 128, 8
        $region76: #{tpu_custom_call.1} parent=59 // pred_fallthru
          _
      $region60: #{tpu_custom_call.1} parent=5 // pred_fallthru
        _
      %p1282 = scmp.le.s32.totalorder 2, %s26
      // Predicated region
      $region77: #{tpu_custom_call.1} parent=5 // pred_check
        %p1283 = pneg %p1282
      $region78: #{tpu_custom_call.1} parent=5 // pred_check_branch
        %1285 = sbr.rel (%p1283) target = $region80
      $region79: #{tpu_custom_call.1} parent=5 // pred_region
        %s1286 = ssub.s32 %s26, 2
        // Predicated region
        $region81: #{tpu_custom_call.1} parent=79 // pred_check
          %p1287 = pneg %p275
        $region82: #{tpu_custom_call.1} parent=79 // pred_check_branch
          %1289 = sbr.rel (%p1287) target = $region84
        $region83: #{tpu_custom_call.1} parent=79 // pred_region
          %s1290 = sand.u32 %s260, 1
          %s1291 = scalar_lea.sflag [#allocation4], %s1290
          %s1292 = sand.u32 %s260, 1
          %s1293 = smul.addr %s1292, 8
          %s1294 = scalar_lea.vmem [#allocation7], %s1293
          %1295 = dma.done %s1291, 128
        $region84: #{tpu_custom_call.1} parent=79 // pred_fallthru
          _
        // Predicated region
        $region85: #{tpu_custom_call.1} parent=79 // pred_check
          %p1296 = pneg %p301
        $region86: #{tpu_custom_call.1} parent=79 // pred_check_branch
          %1298 = sbr.rel (%p1296) target = $region88
        $region87: #{tpu_custom_call.1} parent=79 // pred_region
          %s1299 = sand.u32 %s286, 1
          %s1300 = scalar_lea.sflag [#allocation9], %s1299
          %s1301 = sand.u32 %s286, 1
          %s1302 = smul.addr %s1301, 32
          %s1303 = scalar_lea.vmem [#allocation8], %s1302
          %1304 = dma.done %s1300, 512
        $region88: #{tpu_custom_call.1} parent=79 // pred_fallthru
          _
      $region80: #{tpu_custom_call.1} parent=5 // pred_fallthru
        _
    $region6: #{tpu_custom_call.1} parent=1 // loop_footer
      %s30 = sadd.s32 1, %s26
    $region7: #{tpu_custom_call.1} parent=1 // loop_footer_branch
      %25 = sbr.rel target = $region3
    $region8: #{tpu_custom_call.1} parent=1 // loop_exit
      _
    %1305 = vsyncpa [#allocation3], 1
    %s1306 = scalar_lea.sflag [#allocation3], 1
    %1307 = vsyncpa %s1306, 1
    %1308 = vsyncpa [#allocation6], 1
    %1309 = vsyncpa [#allocation4], 1
    %s1310 = scalar_lea.sflag [#allocation4], 1
    %1311 = vsyncpa %s1310, 1
    %1312 = vsyncpa [#allocation9], 1
    %s1313 = scalar_lea.sflag [#allocation9], 1
    %1314 = vsyncpa %s1313, 1

</llo_original>
